<compile_context>
chip_gen: v6e
topology: v6e:2x2x1
jax: 0.10.0
libtpu: 0.0.40
codegen_flags: <defaults>
</compile_context>

<pallas_src>
import math

import jax
import jax.numpy as jnp
from jax.experimental import pallas as pl
from jax.experimental.pallas import tpu as pltpu


def _mlp_kernel(x_ref,
                w1_ref, b1_ref,
                w2_ref, b2_ref,
                w3_ref, b3_ref,
                w4_ref, b4_ref,
                w5_ref, b5_ref,
                w6_ref, b6_ref,
                o_ref):
    # x_ref: (in_dim, TB)  -- batch on the lane axis.
    h = x_ref[...]

    # Layer 1: Linear + Tanh
    h = jnp.dot(w1_ref[...], h, preferred_element_type=jnp.float32) + b1_ref[...]
    h = jnp.tanh(h)

    # Layer 2: Linear + Tanh
    h = jnp.dot(w2_ref[...], h, preferred_element_type=jnp.float32) + b2_ref[...]
    h = jnp.tanh(h)

    # Layer 3: Linear + ReLU
    h = jnp.dot(w3_ref[...], h, preferred_element_type=jnp.float32) + b3_ref[...]
    h = jnp.maximum(h, 0.0)

    # Layer 4: Linear + ReLU
    h = jnp.dot(w4_ref[...], h, preferred_element_type=jnp.float32) + b4_ref[...]
    h = jnp.maximum(h, 0.0)

    # Layer 5: Linear + Tanh
    h = jnp.dot(w5_ref[...], h, preferred_element_type=jnp.float32) + b5_ref[...]
    h = jnp.tanh(h)

    # Layer 6: Linear (no activation); (out_dim, TB) lane-dense store.
    out = jnp.dot(w6_ref[...], h, preferred_element_type=jnp.float32) + b6_ref[...]
    o_ref[...] = out.astype(o_ref.dtype)


def net_forward(x, params, *, tb=512):
    """Fused MLP forward pass as a single batch-tiled Pallas TPU kernel.

    x: (batch, inport_size) float32
    params: flat list [w1, b1, ..., w6, b6] with wi of shape
            (out_features, in_features)  (PyTorch nn.Linear.weight layout)
            and bi of shape (out_features, 1).
    Returns (batch, output_size) float32.
    """
    batch, in_dim = x.shape
    hidden = params[0].shape[0]
    out_dim = params[-2].shape[0]

    # Pad the batch up to a multiple of the lane tile so every block is full.
    n_tiles = pl.cdiv(batch, tb)
    padded = n_tiles * tb

    xt = x.T  # (in_dim, batch) -- batch on the lane axis
    if padded != batch:
        xt = jnp.pad(xt, ((0, 0), (0, padded - batch)))

    # x / out are tiled along the batch (lane) axis; params are full-array
    # blocks with constant index maps -> resident in VMEM across all steps.
    x_spec = pl.BlockSpec((in_dim, tb), lambda i: (0, i))
    out_spec = pl.BlockSpec((out_dim, tb), lambda i: (0, i))
    param_specs = [pl.BlockSpec(p.shape, lambda i: (0, 0)) for p in params]

    flops = 2 * padded * (in_dim * hidden + 4 * hidden * hidden + hidden * out_dim)
    transcendentals = 3 * hidden * padded  # three tanh layers
    param_bytes = sum(int(p.size) * 4 for p in params)
    bytes_accessed = 4 * padded * (in_dim + out_dim) + param_bytes

    out_t = pl.pallas_call(
        _mlp_kernel,
        out_shape=jax.ShapeDtypeStruct((out_dim, padded), jnp.float32),
        grid=(n_tiles,),
        in_specs=[x_spec] + param_specs,
        out_specs=out_spec,
        compiler_params=pltpu.CompilerParams(
            dimension_semantics=("parallel",),
        ),
        cost_estimate=pl.CostEstimate(
            flops=int(flops),
            transcendentals=int(transcendentals),
            bytes_accessed=int(bytes_accessed),
        ),
    )(xt, *params)

    return out_t[:, :batch].T  # (batch, out_dim)


def init_params(key, inport_size, hidden_size, output_size):
    """PyTorch-style init: U(-1/sqrt(fan_in), 1/sqrt(fan_in)).

    Weights are stored PyTorch-native: (out_features, in_features);
    biases as (out_features, 1).
    """
    dims = [inport_size] + [hidden_size] * 5 + [output_size]
    params = []
    for i in range(6):
        fan_in, fan_out = dims[i], dims[i + 1]
        key, kw, kb = jax.random.split(key, 3)
        bound = 1.0 / math.sqrt(fan_in)
        w = jax.random.uniform(kw, (fan_out, fan_in), jnp.float32, -bound, bound)
        b = jax.random.uniform(kb, (fan_out, 1), jnp.float32, -bound, bound)
        params += [w, b]
    return params


def _reference_forward(x, params):
    """Plain-JAX reference (torch semantics: y = x @ W.T + b)."""
    h = x
    acts = [jnp.tanh, jnp.tanh,
            lambda v: jnp.maximum(v, 0.0), lambda v: jnp.maximum(v, 0.0),
            jnp.tanh, lambda v: v]
    for i in range(6):
        w, b = params[2 * i], params[2 * i + 1]
        h = acts[i](h @ w.T + b.reshape(1, -1))
    return h


if __name__ == "__main__":
    # PINN-style sizes: input = (x, t) coords, scalar output.
    inport_size, hidden_size, output_size = 2, 32, 1

    key = jax.random.PRNGKey(0)
    params = init_params(key, inport_size, hidden_size, output_size)

    # Case 1: batch is a multiple of the lane tile (exercises the grid).
    key, kx1 = jax.random.split(key)
    x1 = jax.random.normal(kx1, (1024, inport_size), jnp.float32)
    out1 = jax.block_until_ready(net_forward(x1, params))
    ref1 = _reference_forward(x1, params)
    assert out1.shape == (1024, output_size)
    assert jnp.allclose(out1, ref1, atol=1e-5, rtol=1e-5)

    # Case 2: ragged batch (exercises the padding path).
    key, kx2 = jax.random.split(key)
    x2 = jax.random.normal(kx2, (200, inport_size), jnp.float32)
    out2 = jax.block_until_ready(net_forward(x2, params))
    ref2 = _reference_forward(x2, params)
    assert out2.shape == (200, output_size)
    assert jnp.allclose(out2, ref2, atol=1e-5, rtol=1e-5)

    print("KERNEL_OK")
</pallas_src>

<mosaic_0001>
module attributes {stable_mosaic.version = 11 : i64} {
  func.func @_mlp_kernel(%arg0: i32, %arg1: memref<2x512xf32, #tpu.memory_space<vmem>>, %arg2: memref<32x2xf32, #tpu.memory_space<vmem>>, %arg3: memref<32x1xf32, #tpu.memory_space<vmem>>, %arg4: memref<32x32xf32, #tpu.memory_space<vmem>>, %arg5: memref<32x1xf32, #tpu.memory_space<vmem>>, %arg6: memref<32x32xf32, #tpu.memory_space<vmem>>, %arg7: memref<32x1xf32, #tpu.memory_space<vmem>>, %arg8: memref<32x32xf32, #tpu.memory_space<vmem>>, %arg9: memref<32x1xf32, #tpu.memory_space<vmem>>, %arg10: memref<32x32xf32, #tpu.memory_space<vmem>>, %arg11: memref<32x1xf32, #tpu.memory_space<vmem>>, %arg12: memref<1x32xf32, #tpu.memory_space<vmem>>, %arg13: memref<1x1xf32, #tpu.memory_space<vmem>>, %arg14: memref<1x512xf32, #tpu.memory_space<vmem>>) attributes {dimension_semantics = [#tpu.dimension_semantics<parallel>], iteration_bounds = array<i64: 2>, scalar_prefetch = 0 : i64, scratch_operands = 0 : i64, tpu.core_type = #tpu.core_type<tc>, window_params = [{transform_indices = @transform_0, window_bounds = array<i64: 2, 512>}, {pipeline_mode = #tpu.pipeline_mode<synchronous>, transform_indices = @transform_1, window_bounds = array<i64: 32, 2>}, {pipeline_mode = #tpu.pipeline_mode<synchronous>, transform_indices = @transform_2, window_bounds = array<i64: 32, 1>}, {pipeline_mode = #tpu.pipeline_mode<synchronous>, transform_indices = @transform_3, window_bounds = array<i64: 32, 32>}, {pipeline_mode = #tpu.pipeline_mode<synchronous>, transform_indices = @transform_4, window_bounds = array<i64: 32, 1>}, {pipeline_mode = #tpu.pipeline_mode<synchronous>, transform_indices = @transform_5, window_bounds = array<i64: 32, 32>}, {pipeline_mode = #tpu.pipeline_mode<synchronous>, transform_indices = @transform_6, window_bounds = array<i64: 32, 1>}, {pipeline_mode = #tpu.pipeline_mode<synchronous>, transform_indices = @transform_7, window_bounds = array<i64: 32, 32>}, {pipeline_mode = #tpu.pipeline_mode<synchronous>, transform_indices = @transform_8, window_bounds = array<i64: 32, 1>}, {pipeline_mode = #tpu.pipeline_mode<synchronous>, transform_indices = @transform_9, window_bounds = array<i64: 32, 32>}, {pipeline_mode = #tpu.pipeline_mode<synchronous>, transform_indices = @transform_10, window_bounds = array<i64: 32, 1>}, {pipeline_mode = #tpu.pipeline_mode<synchronous>, transform_indices = @transform_11, window_bounds = array<i64: 1, 32>}, {pipeline_mode = #tpu.pipeline_mode<synchronous>, transform_indices = @transform_12, window_bounds = array<i64: 1, 1>}, {transform_indices = @transform_13, window_bounds = array<i64: 1, 512>}]} {
    %c0 = arith.constant 0 : index
    %c0_0 = arith.constant 0 : index
    %0 = vector.load %arg1[%c0, %c0_0] : memref<2x512xf32, #tpu.memory_space<vmem>>, vector<2x512xf32>
    %c0_1 = arith.constant 0 : index
    %c0_2 = arith.constant 0 : index
    %1 = vector.load %arg2[%c0_1, %c0_2] : memref<32x2xf32, #tpu.memory_space<vmem>>, vector<32x2xf32>
    %cst = arith.constant dense<0.000000e+00> : vector<32x512xf32>
    %2 = tpu.matmul %1, %0, %cst {dimension_numbers = #tpu.dot_dimension_numbers<[1], [0], [0], [1], [0, 0, 1, 1], [], []>} : vector<32x2xf32>, vector<2x512xf32>, vector<32x512xf32> -> vector<32x512xf32>
    %c0_3 = arith.constant 0 : index
    %c0_4 = arith.constant 0 : index
    %3 = vector.load %arg3[%c0_3, %c0_4] : memref<32x1xf32, #tpu.memory_space<vmem>>, vector<32x1xf32>
    %4 = vector.broadcast %3 : vector<32x1xf32> to vector<32x512xf32>
    %5 = arith.addf %2, %4 : vector<32x512xf32>
    %6 = math.tanh %5 : vector<32x512xf32>
    %c0_5 = arith.constant 0 : index
    %c0_6 = arith.constant 0 : index
    %7 = vector.load %arg4[%c0_5, %c0_6] : memref<32x32xf32, #tpu.memory_space<vmem>>, vector<32x32xf32>
    %cst_7 = arith.constant dense<0.000000e+00> : vector<32x512xf32>
    %8 = tpu.matmul %7, %6, %cst_7 {dimension_numbers = #tpu.dot_dimension_numbers<[1], [0], [0], [1], [0, 0, 1, 1], [], []>} : vector<32x32xf32>, vector<32x512xf32>, vector<32x512xf32> -> vector<32x512xf32>
    %c0_8 = arith.constant 0 : index
    %c0_9 = arith.constant 0 : index
    %9 = vector.load %arg5[%c0_8, %c0_9] : memref<32x1xf32, #tpu.memory_space<vmem>>, vector<32x1xf32>
    %10 = vector.broadcast %9 : vector<32x1xf32> to vector<32x512xf32>
    %11 = arith.addf %8, %10 : vector<32x512xf32>
    %12 = math.tanh %11 : vector<32x512xf32>
    %c0_10 = arith.constant 0 : index
    %c0_11 = arith.constant 0 : index
    %13 = vector.load %arg6[%c0_10, %c0_11] : memref<32x32xf32, #tpu.memory_space<vmem>>, vector<32x32xf32>
    %cst_12 = arith.constant dense<0.000000e+00> : vector<32x512xf32>
    %14 = tpu.matmul %13, %12, %cst_12 {dimension_numbers = #tpu.dot_dimension_numbers<[1], [0], [0], [1], [0, 0, 1, 1], [], []>} : vector<32x32xf32>, vector<32x512xf32>, vector<32x512xf32> -> vector<32x512xf32>
    %c0_13 = arith.constant 0 : index
    %c0_14 = arith.constant 0 : index
    %15 = vector.load %arg7[%c0_13, %c0_14] : memref<32x1xf32, #tpu.memory_space<vmem>>, vector<32x1xf32>
    %16 = vector.broadcast %15 : vector<32x1xf32> to vector<32x512xf32>
    %17 = arith.addf %14, %16 : vector<32x512xf32>
    %cst_15 = arith.constant 0.000000e+00 : f32
    %18 = vector.broadcast %cst_15 : f32 to vector<32x512xf32>
    %19 = arith.maximumf %17, %18 : vector<32x512xf32>
    %c0_16 = arith.constant 0 : index
    %c0_17 = arith.constant 0 : index
    %20 = vector.load %arg8[%c0_16, %c0_17] : memref<32x32xf32, #tpu.memory_space<vmem>>, vector<32x32xf32>
    %cst_18 = arith.constant dense<0.000000e+00> : vector<32x512xf32>
    %21 = tpu.matmul %20, %19, %cst_18 {dimension_numbers = #tpu.dot_dimension_numbers<[1], [0], [0], [1], [0, 0, 1, 1], [], []>} : vector<32x32xf32>, vector<32x512xf32>, vector<32x512xf32> -> vector<32x512xf32>
    %c0_19 = arith.constant 0 : index
    %c0_20 = arith.constant 0 : index
    %22 = vector.load %arg9[%c0_19, %c0_20] : memref<32x1xf32, #tpu.memory_space<vmem>>, vector<32x1xf32>
    %23 = vector.broadcast %22 : vector<32x1xf32> to vector<32x512xf32>
    %24 = arith.addf %21, %23 : vector<32x512xf32>
    %cst_21 = arith.constant 0.000000e+00 : f32
    %25 = vector.broadcast %cst_21 : f32 to vector<32x512xf32>
    %26 = arith.maximumf %24, %25 : vector<32x512xf32>
    %c0_22 = arith.constant 0 : index
    %c0_23 = arith.constant 0 : index
    %27 = vector.load %arg10[%c0_22, %c0_23] : memref<32x32xf32, #tpu.memory_space<vmem>>, vector<32x32xf32>
    %cst_24 = arith.constant dense<0.000000e+00> : vector<32x512xf32>
    %28 = tpu.matmul %27, %26, %cst_24 {dimension_numbers = #tpu.dot_dimension_numbers<[1], [0], [0], [1], [0, 0, 1, 1], [], []>} : vector<32x32xf32>, vector<32x512xf32>, vector<32x512xf32> -> vector<32x512xf32>
    %c0_25 = arith.constant 0 : index
    %c0_26 = arith.constant 0 : index
    %29 = vector.load %arg11[%c0_25, %c0_26] : memref<32x1xf32, #tpu.memory_space<vmem>>, vector<32x1xf32>
    %30 = vector.broadcast %29 : vector<32x1xf32> to vector<32x512xf32>
    %31 = arith.addf %28, %30 : vector<32x512xf32>
    %32 = math.tanh %31 : vector<32x512xf32>
    %c0_27 = arith.constant 0 : index
    %c0_28 = arith.constant 0 : index
    %33 = vector.load %arg12[%c0_27, %c0_28] : memref<1x32xf32, #tpu.memory_space<vmem>>, vector<1x32xf32>
    %cst_29 = arith.constant dense<0.000000e+00> : vector<1x512xf32>
    %34 = tpu.matmul %33, %32, %cst_29 {dimension_numbers = #tpu.dot_dimension_numbers<[1], [0], [0], [1], [0, 0, 1, 1], [], []>} : vector<1x32xf32>, vector<32x512xf32>, vector<1x512xf32> -> vector<1x512xf32>
    %c0_30 = arith.constant 0 : index
    %c0_31 = arith.constant 0 : index
    %35 = vector.load %arg13[%c0_30, %c0_31] : memref<1x1xf32, #tpu.memory_space<vmem>>, vector<1x1xf32>
    %36 = vector.broadcast %35 : vector<1x1xf32> to vector<1x512xf32>
    %37 = arith.addf %34, %36 : vector<1x512xf32>
    %c0_32 = arith.constant 0 : index
    %c0_33 = arith.constant 0 : index
    %38 = vector.load %arg14[%c0_32, %c0_33] : memref<1x512xf32, #tpu.memory_space<vmem>>, vector<1x512xf32>
    tpu.vector_store %arg14[%c0_32, %c0_33], %37 {strides = array<i32>} : memref<1x512xf32, #tpu.memory_space<vmem>>, vector<1x512xf32>,
    return
  }
  func.func @transform_0(%arg0: i32) -> (i32, i32) {
    %c0_i32 = arith.constant 0 : i32
    %c0_i32_0 = arith.constant 0 : i32
    return %c0_i32, %arg0 : i32, i32
  }
  func.func @transform_1(%arg0: i32) -> (i32, i32) {
    %c0_i32 = arith.constant 0 : i32
    %c0_i32_0 = arith.constant 0 : i32
    %c0_i32_1 = arith.constant 0 : i32
    return %c0_i32, %c0_i32_0 : i32, i32
  }
  func.func @transform_2(%arg0: i32) -> (i32, i32) {
    %c0_i32 = arith.constant 0 : i32
    %c0_i32_0 = arith.constant 0 : i32
    %c0_i32_1 = arith.constant 0 : i32
    return %c0_i32, %c0_i32_0 : i32, i32
  }
  func.func @transform_3(%arg0: i32) -> (i32, i32) {
    %c0_i32 = arith.constant 0 : i32
    %c0_i32_0 = arith.constant 0 : i32
    %c0_i32_1 = arith.constant 0 : i32
    return %c0_i32, %c0_i32_0 : i32, i32
  }
  func.func @transform_4(%arg0: i32) -> (i32, i32) {
    %c0_i32 = arith.constant 0 : i32
    %c0_i32_0 = arith.constant 0 : i32
    %c0_i32_1 = arith.constant 0 : i32
    return %c0_i32, %c0_i32_0 : i32, i32
  }
  func.func @transform_5(%arg0: i32) -> (i32, i32) {
    %c0_i32 = arith.constant 0 : i32
    %c0_i32_0 = arith.constant 0 : i32
    %c0_i32_1 = arith.constant 0 : i32
    return %c0_i32, %c0_i32_0 : i32, i32
  }
  func.func @transform_6(%arg0: i32) -> (i32, i32) {
    %c0_i32 = arith.constant 0 : i32
    %c0_i32_0 = arith.constant 0 : i32
    %c0_i32_1 = arith.constant 0 : i32
    return %c0_i32, %c0_i32_0 : i32, i32
  }
  func.func @transform_7(%arg0: i32) -> (i32, i32) {
    %c0_i32 = arith.constant 0 : i32
    %c0_i32_0 = arith.constant 0 : i32
    %c0_i32_1 = arith.constant 0 : i32
    return %c0_i32, %c0_i32_0 : i32, i32
  }
  func.func @transform_8(%arg0: i32) -> (i32, i32) {
    %c0_i32 = arith.constant 0 : i32
    %c0_i32_0 = arith.constant 0 : i32
    %c0_i32_1 = arith.constant 0 : i32
    return %c0_i32, %c0_i32_0 : i32, i32
  }
  func.func @transform_9(%arg0: i32) -> (i32, i32) {
    %c0_i32 = arith.constant 0 : i32
    %c0_i32_0 = arith.constant 0 : i32
    %c0_i32_1 = arith.constant 0 : i32
    return %c0_i32, %c0_i32_0 : i32, i32
  }
  func.func @transform_10(%arg0: i32) -> (i32, i32) {
    %c0_i32 = arith.constant 0 : i32
    %c0_i32_0 = arith.constant 0 : i32
    %c0_i32_1 = arith.constant 0 : i32
    return %c0_i32, %c0_i32_0 : i32, i32
  }
  func.func @transform_11(%arg0: i32) -> (i32, i32) {
    %c0_i32 = arith.constant 0 : i32
    %c0_i32_0 = arith.constant 0 : i32
    %c0_i32_1 = arith.constant 0 : i32
    return %c0_i32, %c0_i32_0 : i32, i32
  }
  func.func @transform_12(%arg0: i32) -> (i32, i32) {
    %c0_i32 = arith.constant 0 : i32
    %c0_i32_0 = arith.constant 0 : i32
    %c0_i32_1 = arith.constant 0 : i32
    return %c0_i32, %c0_i32_0 : i32, i32
  }
  func.func @transform_13(%arg0: i32) -> (i32, i32) {
    %c0_i32 = arith.constant 0 : i32
    %c0_i32_0 = arith.constant 0 : i32
    return %c0_i32, %arg0 : i32, i32
  }
}

</mosaic_0001>

<llo_original>
// kernel: tpu_custom_call.1
$region0: #{tpu_custom_call.1}
  #allocation0 [shape = 'u32[]', space=smem, size = 0x4, offset = 0x4, fixed_abs, tag = 'smem constant byte address 0x4 - core index']
  #allocation1 [shape = 'u32[144,128]{1,0:T(1,128)}', space=vmem, size = 0x12000, scoped, tag = 'internal scratch']
  #allocation2 [shape = 'f32[1,1]{1,0:T(1,128)S(1)}', space=vmem, size = 0x200, scoped, tag = 'scoped memory for tpu_custom_call.1']
  %s0 = inlined_call_operand.vmem [shape: f32[2,1024], index: 0, kind: input, shape index: {}]
  %s1 = inlined_call_operand.vmem [shape: f32[32,2], index: 1, kind: input, shape index: {}]
  %s2 = inlined_call_operand.vmem [shape: f32[32,1], index: 2, kind: input, shape index: {}]
  %s3 = inlined_call_operand.vmem [shape: f32[32,32], index: 3, kind: input, shape index: {}]
  %s4 = inlined_call_operand.vmem [shape: f32[32,1], index: 4, kind: input, shape index: {}]
  %s5 = inlined_call_operand.vmem [shape: f32[32,32], index: 5, kind: input, shape index: {}]
  %s6 = inlined_call_operand.vmem [shape: f32[32,1], index: 6, kind: input, shape index: {}]
  %s7 = inlined_call_operand.vmem [shape: f32[32,32], index: 7, kind: input, shape index: {}]
  %s8 = inlined_call_operand.vmem [shape: f32[32,1], index: 8, kind: input, shape index: {}]
  %s9 = inlined_call_operand.vmem [shape: f32[32,32], index: 9, kind: input, shape index: {}]
  %s10 = inlined_call_operand.vmem [shape: f32[32,1], index: 10, kind: input, shape index: {}]
  %s11 = inlined_call_operand.vmem [shape: f32[1,32], index: 11, kind: input, shape index: {}]
  %s12 = inlined_call_operand.<no memory space> [shape: f32[1,1], index: 12, kind: input, shape index: {}]
  %s13 = inlined_call_operand.hbm [shape: f32[1,1024], index: 13, kind: output, shape index: {}]
  %s14 = sld [smem:[#allocation0]]
  $region85: #{tpu_custom_call.1} parent=0
    _
  %s16 = ssub.s32 1, %s14
  %s17 = scalar_select 0, %s16, %s14
  %v18 = vstv %s12
  %19 = vst [vmem:[#allocation2] sm:$0x1] %v18
  $region1: #{tpu_custom_call.1} parent=0
    #allocation3 [shape = 'u8[4096]{0}', space=vmem, size = 0x1000, scoped, tag = 'output window, operand 0']
    #allocation4 [shape = 's32[2]{0}', space=sflag, size = 0x8, scoped, tag = 'scoped memory for tpu_custom_call.1']
    %20 = vsyncpa [#allocation4], 0
    %s21 = scalar_lea.sflag [#allocation4], 1
    %22 = vsyncpa %s21, 0
    loop: start=0, step=1, limit=4
    $region2: #{tpu_custom_call.1} parent=1 // loop_pre_header
      _
    $region3: #{tpu_custom_call.1} parent=1 // loop_header
      %s24 = sphi 0, %s28
      %p25 = scmp.ge.s32.totalorder %s24, 4
      %s34 = sphi 0, %s36
      %s37 = sphi 0, %s34
      %s38 = sphi 0, %s37
      %s54 = sphi 0, %s38
      %s58 = sphi 0, %s58
      %s60 = sphi 0, %s58
      %s61 = sphi 0, %s60
      %s75 = sphi 0, %s61
      %s79 = sphi 0, %s79
      %s81 = sphi 0, %s79
      %s82 = sphi 0, %s81
      %s96 = sphi 0, %s82
      %s100 = sphi 0, %s100
      %s102 = sphi 0, %s100
      %s103 = sphi 0, %s102
      %s117 = sphi 0, %s103
      %s121 = sphi 0, %s121
      %s123 = sphi 0, %s121
      %s124 = sphi 0, %s123
      %s138 = sphi 0, %s124
      %s142 = sphi 0, %s142
      %s144 = sphi 0, %s142
      %s145 = sphi 0, %s144
      %s159 = sphi 0, %s145
      %s163 = sphi 0, %s163
      %s165 = sphi 0, %s163
      %s166 = sphi 0, %s165
      %s180 = sphi 0, %s166
      %s184 = sphi 0, %s184
      %s186 = sphi 0, %s184
      %s187 = sphi 0, %s186
      %s201 = sphi 0, %s187
      %s205 = sphi 0, %s205
      %s207 = sphi 0, %s205
      %s208 = sphi 0, %s207
      %s222 = sphi 0, %s208
      %s226 = sphi 0, %s226
      %s228 = sphi 0, %s226
      %s229 = sphi 0, %s228
      %s243 = sphi 0, %s229
      %s247 = sphi 0, %s247
      %s249 = sphi 0, %s247
      %s250 = sphi 0, %s249
      %s264 = sphi 0, %s250
      %s268 = sphi 0, %s268
      %s270 = sphi 0, %s268
      %s271 = sphi 0, %s270
      %s285 = sphi 0, %s271
      %s289 = sphi 0, %s289
      %s291 = sphi 0, %s289
      %s292 = sphi 0, %s291
      %s306 = sphi 0, %s292
      %s312 = sphi 0, %s314
      %s315 = sphi 0, %s312
      %s316 = sphi 0, %s315
      %s332 = sphi 0, %s316
    $region4: #{tpu_custom_call.1} parent=1 // loop_header_branch
      %27 = sbr.rel (%p25) target = $region8
    $region5: #{tpu_custom_call.1} parent=1 // loop_body
      %s29 = ssub.s32 %s24, 1
      %s30 = ssub.s32 %s24, 2
      %s31 = sadd.s32 %s24, 1
      %s32 = ssub.s32 %s24, %s31
      %p33 = scmp.eq.s32.totalorder %s32, 0
      %s35 = sadd.s32 %s34, 1
      %s36 = scalar_select %p33, %s34, %s35
      %p39 = pneg %p33
      %p40 = scmp.eq.s32.totalorder %s24, 1
      %p41 = por %p39, %p40
      %p42 = scmp.ne.s32.totalorder %s34, %s37
      %p43 = scmp.eq.s32.totalorder %s24, 0
      %p44 = por %p42, %p43
      %p45 = scmp.ne.s32.totalorder %s34, %s37
      %p46 = scmp.eq.s32.totalorder %s29, 1
      %p47 = por %p45, %p46
      %p48 = scmp.ne.s32.totalorder %s37, %s38
      %p49 = scmp.eq.s32.totalorder %s29, 0
      %p50 = por %p48, %p49
      %p51 = scmp.ne.s32.totalorder %s37, %s38
      %p52 = scmp.eq.s32.totalorder %s30, 1
      %p53 = por %p51, %p52
      %p55 = scmp.ne.s32.totalorder %s38, %s54
      %p56 = scmp.eq.s32.totalorder %s30, 0
      %p57 = por %p55, %p56
      %s59 = sadd.s32 %s58, 1
      %p62 = scmp.eq.s32.totalorder %s24, 1
      %p63 = scmp.ne.s32.totalorder %s58, %s60
      %p64 = scmp.eq.s32.totalorder %s24, 0
      %p65 = por %p63, %p64
      %p66 = scmp.ne.s32.totalorder %s58, %s60
      %p67 = scmp.eq.s32.totalorder %s29, 1
      %p68 = por %p66, %p67
      %p69 = scmp.ne.s32.totalorder %s60, %s61
      %p70 = scmp.eq.s32.totalorder %s29, 0
      %p71 = por %p69, %p70
      %p72 = scmp.ne.s32.totalorder %s60, %s61
      %p73 = scmp.eq.s32.totalorder %s30, 1
      %p74 = por %p72, %p73
      %p76 = scmp.ne.s32.totalorder %s61, %s75
      %p77 = scmp.eq.s32.totalorder %s30, 0
      %p78 = por %p76, %p77
      %s80 = sadd.s32 %s79, 1
      %p83 = scmp.eq.s32.totalorder %s24, 1
      %p84 = scmp.ne.s32.totalorder %s79, %s81
      %p85 = scmp.eq.s32.totalorder %s24, 0
      %p86 = por %p84, %p85
      %p87 = scmp.ne.s32.totalorder %s79, %s81
      %p88 = scmp.eq.s32.totalorder %s29, 1
      %p89 = por %p87, %p88
      %p90 = scmp.ne.s32.totalorder %s81, %s82
      %p91 = scmp.eq.s32.totalorder %s29, 0
      %p92 = por %p90, %p91
      %p93 = scmp.ne.s32.totalorder %s81, %s82
      %p94 = scmp.eq.s32.totalorder %s30, 1
      %p95 = por %p93, %p94
      %p97 = scmp.ne.s32.totalorder %s82, %s96
      %p98 = scmp.eq.s32.totalorder %s30, 0
      %p99 = por %p97, %p98
      %s101 = sadd.s32 %s100, 1
      %p104 = scmp.eq.s32.totalorder %s24, 1
      %p105 = scmp.ne.s32.totalorder %s100, %s102
      %p106 = scmp.eq.s32.totalorder %s24, 0
      %p107 = por %p105, %p106
      %p108 = scmp.ne.s32.totalorder %s100, %s102
      %p109 = scmp.eq.s32.totalorder %s29, 1
      %p110 = por %p108, %p109
      %p111 = scmp.ne.s32.totalorder %s102, %s103
      %p112 = scmp.eq.s32.totalorder %s29, 0
      %p113 = por %p111, %p112
      %p114 = scmp.ne.s32.totalorder %s102, %s103
      %p115 = scmp.eq.s32.totalorder %s30, 1
      %p116 = por %p114, %p115
      %p118 = scmp.ne.s32.totalorder %s103, %s117
      %p119 = scmp.eq.s32.totalorder %s30, 0
      %p120 = por %p118, %p119
      %s122 = sadd.s32 %s121, 1
      %p125 = scmp.eq.s32.totalorder %s24, 1
      %p126 = scmp.ne.s32.totalorder %s121, %s123
      %p127 = scmp.eq.s32.totalorder %s24, 0
      %p128 = por %p126, %p127
      %p129 = scmp.ne.s32.totalorder %s121, %s123
      %p130 = scmp.eq.s32.totalorder %s29, 1
      %p131 = por %p129, %p130
      %p132 = scmp.ne.s32.totalorder %s123, %s124
      %p133 = scmp.eq.s32.totalorder %s29, 0
      %p134 = por %p132, %p133
      %p135 = scmp.ne.s32.totalorder %s123, %s124
      %p136 = scmp.eq.s32.totalorder %s30, 1
      %p137 = por %p135, %p136
      %p139 = scmp.ne.s32.totalorder %s124, %s138
      %p140 = scmp.eq.s32.totalorder %s30, 0
      %p141 = por %p139, %p140
      %s143 = sadd.s32 %s142, 1
      %p146 = scmp.eq.s32.totalorder %s24, 1
      %p147 = scmp.ne.s32.totalorder %s142, %s144
      %p148 = scmp.eq.s32.totalorder %s24, 0
      %p149 = por %p147, %p148
      %p150 = scmp.ne.s32.totalorder %s142, %s144
      %p151 = scmp.eq.s32.totalorder %s29, 1
      %p152 = por %p150, %p151
      %p153 = scmp.ne.s32.totalorder %s144, %s145
      %p154 = scmp.eq.s32.totalorder %s29, 0
      %p155 = por %p153, %p154
      %p156 = scmp.ne.s32.totalorder %s144, %s145
      %p157 = scmp.eq.s32.totalorder %s30, 1
      %p158 = por %p156, %p157
      %p160 = scmp.ne.s32.totalorder %s145, %s159
      %p161 = scmp.eq.s32.totalorder %s30, 0
      %p162 = por %p160, %p161
      %s164 = sadd.s32 %s163, 1
      %p167 = scmp.eq.s32.totalorder %s24, 1
      %p168 = scmp.ne.s32.totalorder %s163, %s165
      %p169 = scmp.eq.s32.totalorder %s24, 0
      %p170 = por %p168, %p169
      %p171 = scmp.ne.s32.totalorder %s163, %s165
      %p172 = scmp.eq.s32.totalorder %s29, 1
      %p173 = por %p171, %p172
      %p174 = scmp.ne.s32.totalorder %s165, %s166
      %p175 = scmp.eq.s32.totalorder %s29, 0
      %p176 = por %p174, %p175
      %p177 = scmp.ne.s32.totalorder %s165, %s166
      %p178 = scmp.eq.s32.totalorder %s30, 1
      %p179 = por %p177, %p178
      %p181 = scmp.ne.s32.totalorder %s166, %s180
      %p182 = scmp.eq.s32.totalorder %s30, 0
      %p183 = por %p181, %p182
      %s185 = sadd.s32 %s184, 1
      %p188 = scmp.eq.s32.totalorder %s24, 1
      %p189 = scmp.ne.s32.totalorder %s184, %s186
      %p190 = scmp.eq.s32.totalorder %s24, 0
      %p191 = por %p189, %p190
      %p192 = scmp.ne.s32.totalorder %s184, %s186
      %p193 = scmp.eq.s32.totalorder %s29, 1
      %p194 = por %p192, %p193
      %p195 = scmp.ne.s32.totalorder %s186, %s187
      %p196 = scmp.eq.s32.totalorder %s29, 0
      %p197 = por %p195, %p196
      %p198 = scmp.ne.s32.totalorder %s186, %s187
      %p199 = scmp.eq.s32.totalorder %s30, 1
      %p200 = por %p198, %p199
      %p202 = scmp.ne.s32.totalorder %s187, %s201
      %p203 = scmp.eq.s32.totalorder %s30, 0
      %p204 = por %p202, %p203
      %s206 = sadd.s32 %s205, 1
      %p209 = scmp.eq.s32.totalorder %s24, 1
      %p210 = scmp.ne.s32.totalorder %s205, %s207
      %p211 = scmp.eq.s32.totalorder %s24, 0
      %p212 = por %p210, %p211
      %p213 = scmp.ne.s32.totalorder %s205, %s207
      %p214 = scmp.eq.s32.totalorder %s29, 1
      %p215 = por %p213, %p214
      %p216 = scmp.ne.s32.totalorder %s207, %s208
      %p217 = scmp.eq.s32.totalorder %s29, 0
      %p218 = por %p216, %p217
      %p219 = scmp.ne.s32.totalorder %s207, %s208
      %p220 = scmp.eq.s32.totalorder %s30, 1
      %p221 = por %p219, %p220
      %p223 = scmp.ne.s32.totalorder %s208, %s222
      %p224 = scmp.eq.s32.totalorder %s30, 0
      %p225 = por %p223, %p224
      %s227 = sadd.s32 %s226, 1
      %p230 = scmp.eq.s32.totalorder %s24, 1
      %p231 = scmp.ne.s32.totalorder %s226, %s228
      %p232 = scmp.eq.s32.totalorder %s24, 0
      %p233 = por %p231, %p232
      %p234 = scmp.ne.s32.totalorder %s226, %s228
      %p235 = scmp.eq.s32.totalorder %s29, 1
      %p236 = por %p234, %p235
      %p237 = scmp.ne.s32.totalorder %s228, %s229
      %p238 = scmp.eq.s32.totalorder %s29, 0
      %p239 = por %p237, %p238
      %p240 = scmp.ne.s32.totalorder %s228, %s229
      %p241 = scmp.eq.s32.totalorder %s30, 1
      %p242 = por %p240, %p241
      %p244 = scmp.ne.s32.totalorder %s229, %s243
      %p245 = scmp.eq.s32.totalorder %s30, 0
      %p246 = por %p244, %p245
      %s248 = sadd.s32 %s247, 1
      %p251 = scmp.eq.s32.totalorder %s24, 1
      %p252 = scmp.ne.s32.totalorder %s247, %s249
      %p253 = scmp.eq.s32.totalorder %s24, 0
      %p254 = por %p252, %p253
      %p255 = scmp.ne.s32.totalorder %s247, %s249
      %p256 = scmp.eq.s32.totalorder %s29, 1
      %p257 = por %p255, %p256
      %p258 = scmp.ne.s32.totalorder %s249, %s250
      %p259 = scmp.eq.s32.totalorder %s29, 0
      %p260 = por %p258, %p259
      %p261 = scmp.ne.s32.totalorder %s249, %s250
      %p262 = scmp.eq.s32.totalorder %s30, 1
      %p263 = por %p261, %p262
      %p265 = scmp.ne.s32.totalorder %s250, %s264
      %p266 = scmp.eq.s32.totalorder %s30, 0
      %p267 = por %p265, %p266
      %s269 = sadd.s32 %s268, 1
      %p272 = scmp.eq.s32.totalorder %s24, 1
      %p273 = scmp.ne.s32.totalorder %s268, %s270
      %p274 = scmp.eq.s32.totalorder %s24, 0
      %p275 = por %p273, %p274
      %p276 = scmp.ne.s32.totalorder %s268, %s270
      %p277 = scmp.eq.s32.totalorder %s29, 1
      %p278 = por %p276, %p277
      %p279 = scmp.ne.s32.totalorder %s270, %s271
      %p280 = scmp.eq.s32.totalorder %s29, 0
      %p281 = por %p279, %p280
      %p282 = scmp.ne.s32.totalorder %s270, %s271
      %p283 = scmp.eq.s32.totalorder %s30, 1
      %p284 = por %p282, %p283
      %p286 = scmp.ne.s32.totalorder %s271, %s285
      %p287 = scmp.eq.s32.totalorder %s30, 0
      %p288 = por %p286, %p287
      %s290 = sadd.s32 %s289, 1
      %p293 = scmp.eq.s32.totalorder %s24, 1
      %p294 = scmp.ne.s32.totalorder %s289, %s291
      %p295 = scmp.eq.s32.totalorder %s24, 0
      %p296 = por %p294, %p295
      %p297 = scmp.ne.s32.totalorder %s289, %s291
      %p298 = scmp.eq.s32.totalorder %s29, 1
      %p299 = por %p297, %p298
      %p300 = scmp.ne.s32.totalorder %s291, %s292
      %p301 = scmp.eq.s32.totalorder %s29, 0
      %p302 = por %p300, %p301
      %p303 = scmp.ne.s32.totalorder %s291, %s292
      %p304 = scmp.eq.s32.totalorder %s30, 1
      %p305 = por %p303, %p304
      %p307 = scmp.ne.s32.totalorder %s292, %s306
      %p308 = scmp.eq.s32.totalorder %s30, 0
      %p309 = por %p307, %p308
      %s310 = ssub.s32 %s24, %s31
      %p311 = scmp.eq.s32.totalorder %s310, 0
      %s313 = sadd.s32 %s312, 1
      %s314 = scalar_select %p311, %s312, %s313
      %p317 = pneg %p311
      %p318 = scmp.eq.s32.totalorder %s24, 1
      %p319 = por %p317, %p318
      %p320 = scmp.ne.s32.totalorder %s312, %s315
      %p321 = scmp.eq.s32.totalorder %s24, 0
      %p322 = por %p320, %p321
      %p323 = scmp.ne.s32.totalorder %s312, %s315
      %p324 = scmp.eq.s32.totalorder %s29, 1
      %p325 = por %p323, %p324
      %p326 = scmp.ne.s32.totalorder %s315, %s316
      %p327 = scmp.eq.s32.totalorder %s29, 0
      %p328 = por %p326, %p327
      %p329 = scmp.ne.s32.totalorder %s315, %s316
      %p330 = scmp.eq.s32.totalorder %s30, 1
      %p331 = por %p329, %p330
      %p333 = scmp.ne.s32.totalorder %s316, %s332
      %p334 = scmp.eq.s32.totalorder %s30, 0
      %p335 = por %p333, %p334
      %p336 = scmp.le.s32.totalorder 1, %s24
      %p337 = scmp.lt.s32.totalorder %s24, 3
      %p338 = pnand %p336, %p337
      %p339 = pneg %p338
      // Predicated region
      $region9: #{tpu_custom_call.1} parent=5 // pred_check
        _
      $region10: #{tpu_custom_call.1} parent=5 // pred_check_branch
        %341 = sbr.rel (%p338) target = $region12
      $region11: #{tpu_custom_call.1} parent=5 // pred_region
        %s342 = ssub.s32 %s24, 1
        // Predicated region
        $region13: #{tpu_custom_call.1} parent=11 // pred_check
          %p343 = pneg %p71
        $region14: #{tpu_custom_call.1} parent=11 // pred_check_branch
          %345 = sbr.rel (%p343) target = $region16
        $region15: #{tpu_custom_call.1} parent=11 // pred_region
          _
        $region16: #{tpu_custom_call.1} parent=11 // pred_fallthru
          _
        // Predicated region
        $region17: #{tpu_custom_call.1} parent=11 // pred_check
          %p346 = pneg %p92
        $region18: #{tpu_custom_call.1} parent=11 // pred_check_branch
          %348 = sbr.rel (%p346) target = $region20
        $region19: #{tpu_custom_call.1} parent=11 // pred_region
          _
        $region20: #{tpu_custom_call.1} parent=11 // pred_fallthru
          _
        // Predicated region
        $region21: #{tpu_custom_call.1} parent=11 // pred_check
          %p349 = pneg %p113
        $region22: #{tpu_custom_call.1} parent=11 // pred_check_branch
          %351 = sbr.rel (%p349) target = $region24
        $region23: #{tpu_custom_call.1} parent=11 // pred_region
          _
        $region24: #{tpu_custom_call.1} parent=11 // pred_fallthru
          _
        // Predicated region
        $region25: #{tpu_custom_call.1} parent=11 // pred_check
          %p352 = pneg %p134
        $region26: #{tpu_custom_call.1} parent=11 // pred_check_branch
          %354 = sbr.rel (%p352) target = $region28
        $region27: #{tpu_custom_call.1} parent=11 // pred_region
          _
        $region28: #{tpu_custom_call.1} parent=11 // pred_fallthru
          _
        // Predicated region
        $region29: #{tpu_custom_call.1} parent=11 // pred_check
          %p355 = pneg %p155
        $region30: #{tpu_custom_call.1} parent=11 // pred_check_branch
          %357 = sbr.rel (%p355) target = $region32
        $region31: #{tpu_custom_call.1} parent=11 // pred_region
          _
        $region32: #{tpu_custom_call.1} parent=11 // pred_fallthru
          _
        // Predicated region
        $region33: #{tpu_custom_call.1} parent=11 // pred_check
          %p358 = pneg %p176
        $region34: #{tpu_custom_call.1} parent=11 // pred_check_branch
          %360 = sbr.rel (%p358) target = $region36
        $region35: #{tpu_custom_call.1} parent=11 // pred_region
          _
        $region36: #{tpu_custom_call.1} parent=11 // pred_fallthru
          _
        // Predicated region
        $region37: #{tpu_custom_call.1} parent=11 // pred_check
          %p361 = pneg %p197
        $region38: #{tpu_custom_call.1} parent=11 // pred_check_branch
          %363 = sbr.rel (%p361) target = $region40
        $region39: #{tpu_custom_call.1} parent=11 // pred_region
          _
        $region40: #{tpu_custom_call.1} parent=11 // pred_fallthru
          _
        // Predicated region
        $region41: #{tpu_custom_call.1} parent=11 // pred_check
          %p364 = pneg %p218
        $region42: #{tpu_custom_call.1} parent=11 // pred_check_branch
          %366 = sbr.rel (%p364) target = $region44
        $region43: #{tpu_custom_call.1} parent=11 // pred_region
          _
        $region44: #{tpu_custom_call.1} parent=11 // pred_fallthru
          _
        // Predicated region
        $region45: #{tpu_custom_call.1} parent=11 // pred_check
          %p367 = pneg %p239
        $region46: #{tpu_custom_call.1} parent=11 // pred_check_branch
          %369 = sbr.rel (%p367) target = $region48
        $region47: #{tpu_custom_call.1} parent=11 // pred_region
          _
        $region48: #{tpu_custom_call.1} parent=11 // pred_fallthru
          _
        // Predicated region
        $region49: #{tpu_custom_call.1} parent=11 // pred_check
          %p370 = pneg %p260
        $region50: #{tpu_custom_call.1} parent=11 // pred_check_branch
          %372 = sbr.rel (%p370) target = $region52
        $region51: #{tpu_custom_call.1} parent=11 // pred_region
          _
        $region52: #{tpu_custom_call.1} parent=11 // pred_fallthru
          _
        // Predicated region
        $region53: #{tpu_custom_call.1} parent=11 // pred_check
          %p373 = pneg %p281
        $region54: #{tpu_custom_call.1} parent=11 // pred_check_branch
          %375 = sbr.rel (%p373) target = $region56
        $region55: #{tpu_custom_call.1} parent=11 // pred_region
          _
        $region56: #{tpu_custom_call.1} parent=11 // pred_fallthru
          _
        // Predicated region
        $region57: #{tpu_custom_call.1} parent=11 // pred_check
          %p376 = pneg %p302
        $region58: #{tpu_custom_call.1} parent=11 // pred_check_branch
          %378 = sbr.rel (%p376) target = $region60
        $region59: #{tpu_custom_call.1} parent=11 // pred_region
          _
        $region60: #{tpu_custom_call.1} parent=11 // pred_fallthru
          _
      $region12: #{tpu_custom_call.1} parent=5 // pred_fallthru
        _
      %p379 = scmp.lt.s32.totalorder %s24, 2
      // Predicated region
      $region61: #{tpu_custom_call.1} parent=5 // pred_check
        %p380 = pneg %p379
      $region62: #{tpu_custom_call.1} parent=5 // pred_check_branch
        %382 = sbr.rel (%p380) target = $region64
      $region63: #{tpu_custom_call.1} parent=5 // pred_region
        // Predicated region
        $region65: #{tpu_custom_call.1} parent=63 // pred_check
          %p383 = pneg %p44
        $region66: #{tpu_custom_call.1} parent=63 // pred_check_branch
          %385 = sbr.rel (%p383) target = $region68
        $region67: #{tpu_custom_call.1} parent=63 // pred_region
          %s386 = smul.u32 4, %s24
          %p387 = scmp.lt.s32.totalorder %s386, 7
          %s388 = scalar_select %p387, %s386, 7
          %s389 = smul.addr %s388, 2
          %s390 = scalar_lea.vmem %s0, %s389
          %s391 = smul.u32 4, %s24
        $region68: #{tpu_custom_call.1} parent=63 // pred_fallthru
          _
      $region64: #{tpu_custom_call.1} parent=5 // pred_fallthru
        _
      %p392 = scmp.le.s32.totalorder 1, %s24
      %p393 = scmp.lt.s32.totalorder %s24, 3
      %p394 = pnand %p392, %p393
      %p395 = pneg %p394
      // Predicated region
      $region69: #{tpu_custom_call.1} parent=5 // pred_check
        _
      $region70: #{tpu_custom_call.1} parent=5 // pred_check_branch
        %397 = sbr.rel (%p394) target = $region72
      $region71: #{tpu_custom_call.1} parent=5 // pred_region
        %s398 = ssub.s32 %s24, 1
        %s399 = smul.u32 4, %s29
        %p400 = scmp.lt.s32.totalorder %s399, 7
        %s401 = scalar_select %p400, %s399, 7
        %s402 = smul.addr %s401, 2
        %s403 = scalar_lea.vmem %s0, %s402
        %p404 = pneg %p50
        %p405 = pneg %p47
        %p406 = pneg %p71
        %p407 = pneg %p68
        %p408 = pneg %p92
        %p409 = pneg %p89
        %p410 = pneg %p113
        %p411 = pneg %p110
        %p412 = pneg %p134
        %p413 = pneg %p131
        %p414 = pneg %p155
        %p415 = pneg %p152
        %p416 = pneg %p176
        %p417 = pneg %p173
        %p418 = pneg %p197
        %p419 = pneg %p194
        %p420 = pneg %p218
        %p421 = pneg %p215
        %p422 = pneg %p239
        %p423 = pneg %p236
        %p424 = pneg %p260
        %p425 = pneg %p257
        %p426 = pneg %p281
        %p427 = pneg %p278
        %p428 = pneg %p302
        %p429 = pneg %p299
        %p430 = pneg %p328
        %p431 = pneg %p325
        %s432 = sand.u32 %s315, 1
        %s433 = scalar_lea.sflag [#allocation4], %s432
        %s434 = sand.u32 %s315, 1
        %s435 = smul.addr %s434, 4
        %s436 = scalar_lea.vmem [#allocation3], %s435
        %s437 = smul.u32 4, %s29
        %p438 = scmp.lt.s32.totalorder %s437, 7
        %s439 = scalar_select %p438, %s437, 7
        %s440 = smul.addr %s439, 2
        %s441 = scalar_lea.vmem %s0, %s440
        %s442 = smul.u32 4, %s29
        %s443 = smul.u32 4, %s29
        %v444 = vld [vmem:[%s441] sm:$0xff]
        %v445 = vld [vmem:[%s1] sm:$0xff]
        %v446 = vld [vmem:[%s1 + $0x8] sm:$0xff]
        %v447 = vld [vmem:[%s1 + $0x10] sm:$0xff]
        %v448 = vld [vmem:[%s1 + $0x18] sm:$0xff]
        %v449 = vld [vmem:[%s2] sm:$0xff]
        %v450 = vld [vmem:[%s2 + $0x8] sm:$0xff]
        %v451 = vld [vmem:[%s2 + $0x10] sm:$0xff]
        %v452 = vld [vmem:[%s2 + $0x18] sm:$0xff]
        %454 = vset.pattern.permute.xlu0 0
        %455 = vperm.xlu0 %454, %v449
        %v456 = vpop.permute.xlu0 %455
        %459 = vset.pattern.permute.xlu0 0
        %460 = vperm.xlu0 %459, %v450
        %v461 = vpop.permute.xlu0 %460
        %464 = vset.pattern.permute.xlu0 0
        %465 = vperm.xlu0 %464, %v451
        %v466 = vpop.permute.xlu0 %465
        %469 = vset.pattern.permute.xlu0 0
        %470 = vperm.xlu0 %469, %v452
        %v471 = vpop.permute.xlu0 %470
        %v474 = vcombine.high %v444, %v444
        %v476 = vunpack.c.l.s4 1983009808
        %v477 = vunpack.c.0.s8 %v476
        %v478 = vlaneseq
        %v479 = vshrl.u32 %v478, 7
        %v480 = vsub.s32 %v477, %v479
        %v481 = vrot.slane %v444, %v480
        %v483 = vunpack.c.l.s4 1983009808
        %v484 = vunpack.c.0.s8 %v483
        %v485 = vlaneseq
        %v486 = vshrl.u32 %v485, 7
        %v487 = vsub.s32 %v484, %v486
        %v488 = vrot.slane %v474, %v487
        %v489 = vcombine.high %v481, %v481
        %v490 = vcombine.high %v488, %v488
        %vm491 = vcmask 15360
        %v493 = vsel %vm491, %v445, 0
        %v496 = vsel %vm491, %v446, 0
        %v499 = vsel %vm491, %v447, 0
        %v502 = vsel %vm491, %v448, 0
        %vm504 = vcmask 1041408
        %v505 = vsel %vm504, %v481, 0
        %v507 = vsel %vm504, %v489, 0
        %v509 = vsel %vm504, %v488, 0
        %v511 = vsel %vm504, %v490, 0
        %513 = vmatprep.subr.mxu0 0.0
        %514 = vmatpush1.msra.mxu0 0.0
        %515 = vmatprep.subr.mxu0 0.0
        %516 = vmatpush1.msra.mxu0 0.0
        %517 = vmatprep.subr.mxu0 0.0
        %518 = vmatpush1.msra.mxu0 0.0
        %519 = vmatprep.subr.mxu0 0.0
        %520 = vmatpush1.msra.mxu0 0.0
        %521 = vmatprep.subr.mxu0 0.0
        %522 = vmatpush1.msra.mxu0 0.0
        %523 = vmatprep.subr.mxu0 0.0
        %524 = vmatpush1.msra.mxu0 0.0
        %525 = vmatprep.subr.mxu0 0.0
        %526 = vmatpush1.msra.mxu0 0.0
        %527 = vmatprep.subr.mxu0 0.0
        %528 = vmatpush1.msra.mxu0 0.0
        %529 = vmatprep.subr.mxu0 0.0
        %530 = vmatpush1.msra.mxu0 0.0
        %531 = vmatprep.subr.mxu0 0.0
        %532 = vmatpush1.msra.mxu0 0.0
        %533 = vmatprep.subr.mxu0 0.0
        %534 = vmatpush1.msra.mxu0 0.0
        %535 = vmatprep.subr.mxu0 0.0
        %536 = vmatpush1.msra.mxu0 0.0
        %537 = vmatprep.subr.mxu0 0.0
        %538 = vmatpush1.msra.mxu0 0.0
        %539 = vmatprep.subr.mxu0 0.0
        %540 = vmatpush1.msra.mxu0 0.0
        %541 = vmatprep.subr.mxu0 0.0
        %542 = vmatpush1.msra.mxu0 0.0
        %543 = vmatprep.subr.mxu0 %v507
        %544 = vmatpush1.msra.mxu0 %v505
        %545 = vmatprep.subr.mxu0 0.0
        %546 = vmatpush2.msra.mxu0 0.0
        %547 = vmatprep.subr.mxu0 0.0
        %548 = vmatpush2.msra.mxu0 0.0
        %549 = vmatprep.subr.mxu0 0.0
        %550 = vmatpush2.msra.mxu0 0.0
        %551 = vmatprep.subr.mxu0 0.0
        %552 = vmatpush2.msra.mxu0 0.0
        %553 = vmatprep.subr.mxu0 0.0
        %554 = vmatpush2.msra.mxu0 0.0
        %555 = vmatprep.subr.mxu0 0.0
        %556 = vmatpush2.msra.mxu0 0.0
        %557 = vmatprep.subr.mxu0 0.0
        %558 = vmatpush2.msra.mxu0 0.0
        %559 = vmatprep.subr.mxu0 0.0
        %560 = vmatpush2.msra.mxu0 0.0
        %561 = vmatprep.subr.mxu0 0.0
        %562 = vmatpush2.msra.mxu0 0.0
        %563 = vmatprep.subr.mxu0 0.0
        %564 = vmatpush2.msra.mxu0 0.0
        %565 = vmatprep.subr.mxu0 0.0
        %566 = vmatpush2.msra.mxu0 0.0
        %567 = vmatprep.subr.mxu0 0.0
        %568 = vmatpush2.msra.mxu0 0.0
        %569 = vmatprep.subr.mxu0 0.0
        %570 = vmatpush2.msra.mxu0 0.0
        %571 = vmatprep.subr.mxu0 0.0
        %572 = vmatpush2.msra.mxu0 0.0
        %573 = vmatprep.subr.mxu0 0.0
        %574 = vmatpush2.msra.mxu0 0.0
        %575 = vmatprep.subr.mxu0 0.0
        %576 = vmatpush2.msra.mxu0 0.0
        %577 = vmatprep.mubr.f32.mxu0 0.0
        %578 = vmatmul.mubr.f32.gmra.mxu0 %v493
        %v579 = vpop.f32.mrf.mxu0
        %v580 = vadd.f32 %v456, %v579
        %v581 = vpop.f32.mrf.mxu0
        %v582 = vadd.f32 %v456, %v581
        %583 = vmatprep.mubr.f32.mxu0 0.0
        %584 = vmatmul.mubr.f32.gmra.mxu0 %v496
        %v585 = vpop.f32.mrf.mxu0
        %v586 = vadd.f32 %v461, %v585
        %v587 = vpop.f32.mrf.mxu0
        %v588 = vadd.f32 %v461, %v587
        %589 = vmatprep.mubr.f32.mxu0 0.0
        %590 = vmatmul.mubr.f32.gmra.mxu0 %v499
        %v591 = vpop.f32.mrf.mxu0
        %v592 = vadd.f32 %v466, %v591
        %v593 = vpop.f32.mrf.mxu0
        %v594 = vadd.f32 %v466, %v593
        %595 = vmatprep.mubr.f32.mxu0 0.0
        %596 = vmatmul.mubr.f32.gmra.mxu0 %v502
        %v597 = vpop.f32.mrf.mxu0
        %v598 = vadd.f32 %v471, %v597
        %v599 = vpop.f32.mrf.mxu0
        %v600 = vadd.f32 %v471, %v599
        %601 = vdwg.mxu0
        %602 = vmatprep.subr.mxu0 0.0
        %603 = vmatpush1.msra.mxu0 0.0
        %604 = vmatprep.subr.mxu0 0.0
        %605 = vmatpush1.msra.mxu0 0.0
        %606 = vmatprep.subr.mxu0 0.0
        %607 = vmatpush1.msra.mxu0 0.0
        %608 = vmatprep.subr.mxu0 0.0
        %609 = vmatpush1.msra.mxu0 0.0
        %610 = vmatprep.subr.mxu0 0.0
        %611 = vmatpush1.msra.mxu0 0.0
        %612 = vmatprep.subr.mxu0 0.0
        %613 = vmatpush1.msra.mxu0 0.0
        %614 = vmatprep.subr.mxu0 0.0
        %615 = vmatpush1.msra.mxu0 0.0
        %616 = vmatprep.subr.mxu0 0.0
        %617 = vmatpush1.msra.mxu0 0.0
        %618 = vmatprep.subr.mxu0 0.0
        %619 = vmatpush1.msra.mxu0 0.0
        %620 = vmatprep.subr.mxu0 0.0
        %621 = vmatpush1.msra.mxu0 0.0
        %622 = vmatprep.subr.mxu0 0.0
        %623 = vmatpush1.msra.mxu0 0.0
        %624 = vmatprep.subr.mxu0 0.0
        %625 = vmatpush1.msra.mxu0 0.0
        %626 = vmatprep.subr.mxu0 0.0
        %627 = vmatpush1.msra.mxu0 0.0
        %628 = vmatprep.subr.mxu0 0.0
        %629 = vmatpush1.msra.mxu0 0.0
        %630 = vmatprep.subr.mxu0 0.0
        %631 = vmatpush1.msra.mxu0 0.0
        %632 = vmatprep.subr.mxu0 %v511
        %633 = vmatpush1.msra.mxu0 %v509
        %634 = vmatprep.subr.mxu0 0.0
        %635 = vmatpush2.msra.mxu0 0.0
        %636 = vmatprep.subr.mxu0 0.0
        %637 = vmatpush2.msra.mxu0 0.0
        %638 = vmatprep.subr.mxu0 0.0
        %639 = vmatpush2.msra.mxu0 0.0
        %640 = vmatprep.subr.mxu0 0.0
        %641 = vmatpush2.msra.mxu0 0.0
        %642 = vmatprep.subr.mxu0 0.0
        %643 = vmatpush2.msra.mxu0 0.0
        %644 = vmatprep.subr.mxu0 0.0
        %645 = vmatpush2.msra.mxu0 0.0
        %646 = vmatprep.subr.mxu0 0.0
        %647 = vmatpush2.msra.mxu0 0.0
        %648 = vmatprep.subr.mxu0 0.0
        %649 = vmatpush2.msra.mxu0 0.0
        %650 = vmatprep.subr.mxu0 0.0
        %651 = vmatpush2.msra.mxu0 0.0
        %652 = vmatprep.subr.mxu0 0.0
        %653 = vmatpush2.msra.mxu0 0.0
        %654 = vmatprep.subr.mxu0 0.0
        %655 = vmatpush2.msra.mxu0 0.0
        %656 = vmatprep.subr.mxu0 0.0
        %657 = vmatpush2.msra.mxu0 0.0
        %658 = vmatprep.subr.mxu0 0.0
        %659 = vmatpush2.msra.mxu0 0.0
        %660 = vmatprep.subr.mxu0 0.0
        %661 = vmatpush2.msra.mxu0 0.0
        %662 = vmatprep.subr.mxu0 0.0
        %663 = vmatpush2.msra.mxu0 0.0
        %664 = vmatprep.subr.mxu0 0.0
        %665 = vmatpush2.msra.mxu0 0.0
        %666 = vmatprep.mubr.f32.mxu0 0.0
        %667 = vmatmul.mubr.f32.gmra.mxu0 %v493
        %v668 = vpop.f32.mrf.mxu0
        %v669 = vadd.f32 %v456, %v668
        %v670 = vpop.f32.mrf.mxu0
        %v671 = vadd.f32 %v456, %v670
        %672 = vmatprep.mubr.f32.mxu0 0.0
        %673 = vmatmul.mubr.f32.gmra.mxu0 %v496
        %v674 = vpop.f32.mrf.mxu0
        %v675 = vadd.f32 %v461, %v674
        %v676 = vpop.f32.mrf.mxu0
        %v677 = vadd.f32 %v461, %v676
        %678 = vmatprep.mubr.f32.mxu0 0.0
        %679 = vmatmul.mubr.f32.gmra.mxu0 %v499
        %v680 = vpop.f32.mrf.mxu0
        %v681 = vadd.f32 %v466, %v680
        %v682 = vpop.f32.mrf.mxu0
        %v683 = vadd.f32 %v466, %v682
        %684 = vmatprep.mubr.f32.mxu0 0.0
        %685 = vmatmul.mubr.f32.gmra.mxu0 %v502
        %v686 = vpop.f32.mrf.mxu0
        %v687 = vadd.f32 %v471, %v686
        %v688 = vpop.f32.mrf.mxu0
        %v689 = vadd.f32 %v471, %v688
        %690 = vdwg.mxu0
        %v691 = vtanh.pop %v580
        %v692 = vtanh.pop %v582
        %v693 = vtanh.pop %v669
        %v694 = vtanh.pop %v671
        %v695 = vtanh.pop %v586
        %v696 = vtanh.pop %v588
        %v697 = vtanh.pop %v675
        %v698 = vtanh.pop %v677
        %v699 = vtanh.pop %v592
        %v700 = vtanh.pop %v594
        %v701 = vtanh.pop %v681
        %v702 = vtanh.pop %v683
        %v703 = vtanh.pop %v598
        %v704 = vtanh.pop %v600
        %v705 = vtanh.pop %v687
        %v706 = vtanh.pop %v689
        %v707 = vld [vmem:[%s3] sm:$0xff]
        %v708 = vld [vmem:[%s3 + $0x8] sm:$0xff]
        %v709 = vld [vmem:[%s3 + $0x10] sm:$0xff]
        %v710 = vld [vmem:[%s3 + $0x18] sm:$0xff]
        %v711 = vld [vmem:[%s4] sm:$0xff]
        %v712 = vld [vmem:[%s4 + $0x8] sm:$0xff]
        %v713 = vld [vmem:[%s4 + $0x10] sm:$0xff]
        %v714 = vld [vmem:[%s4 + $0x18] sm:$0xff]
        %716 = vset.pattern.permute.xlu0 0
        %717 = vperm.xlu0 %716, %v711
        %v718 = vpop.permute.xlu0 %717
        %721 = vset.pattern.permute.xlu0 0
        %722 = vperm.xlu0 %721, %v712
        %v723 = vpop.permute.xlu0 %722
        %726 = vset.pattern.permute.xlu0 0
        %727 = vperm.xlu0 %726, %v713
        %v728 = vpop.permute.xlu0 %727
        %731 = vset.pattern.permute.xlu0 0
        %732 = vperm.xlu0 %731, %v714
        %v733 = vpop.permute.xlu0 %732
        %vm735 = vcmask 261120
        %v737 = vsel %vm735, %v707, 0
        %v740 = vsel %vm735, %v708, 0
        %v743 = vsel %vm735, %v709, 0
        %v746 = vsel %vm735, %v710, 0
        %748 = vmatprep.subr.mxu0 0.0
        %749 = vmatpush1.msra.mxu0 0.0
        %750 = vmatprep.subr.mxu0 0.0
        %751 = vmatpush1.msra.mxu0 0.0
        %752 = vmatprep.subr.mxu0 0.0
        %753 = vmatpush1.msra.mxu0 0.0
        %754 = vmatprep.subr.mxu0 0.0
        %755 = vmatpush1.msra.mxu0 0.0
        %756 = vmatprep.subr.mxu0 0.0
        %757 = vmatpush1.msra.mxu0 0.0
        %758 = vmatprep.subr.mxu0 0.0
        %759 = vmatpush1.msra.mxu0 0.0
        %760 = vmatprep.subr.mxu0 0.0
        %761 = vmatpush1.msra.mxu0 0.0
        %762 = vmatprep.subr.mxu0 0.0
        %763 = vmatpush1.msra.mxu0 0.0
        %764 = vmatprep.subr.mxu0 0.0
        %765 = vmatpush1.msra.mxu0 0.0
        %766 = vmatprep.subr.mxu0 0.0
        %767 = vmatpush1.msra.mxu0 0.0
        %768 = vmatprep.subr.mxu0 0.0
        %769 = vmatpush1.msra.mxu0 0.0
        %770 = vmatprep.subr.mxu0 0.0
        %771 = vmatpush1.msra.mxu0 0.0
        %772 = vmatprep.subr.mxu0 %v704
        %773 = vmatpush1.msra.mxu0 %v703
        %774 = vmatprep.subr.mxu0 %v700
        %775 = vmatpush1.msra.mxu0 %v699
        %776 = vmatprep.subr.mxu0 %v696
        %777 = vmatpush1.msra.mxu0 %v695
        %778 = vmatprep.subr.mxu0 %v692
        %779 = vmatpush1.msra.mxu0 %v691
        %780 = vmatprep.subr.mxu0 0.0
        %781 = vmatpush2.msra.mxu0 0.0
        %782 = vmatprep.subr.mxu0 0.0
        %783 = vmatpush2.msra.mxu0 0.0
        %784 = vmatprep.subr.mxu0 0.0
        %785 = vmatpush2.msra.mxu0 0.0
        %786 = vmatprep.subr.mxu0 0.0
        %787 = vmatpush2.msra.mxu0 0.0
        %788 = vmatprep.subr.mxu0 0.0
        %789 = vmatpush2.msra.mxu0 0.0
        %790 = vmatprep.subr.mxu0 0.0
        %791 = vmatpush2.msra.mxu0 0.0
        %792 = vmatprep.subr.mxu0 0.0
        %793 = vmatpush2.msra.mxu0 0.0
        %794 = vmatprep.subr.mxu0 0.0
        %795 = vmatpush2.msra.mxu0 0.0
        %796 = vmatprep.subr.mxu0 0.0
        %797 = vmatpush2.msra.mxu0 0.0
        %798 = vmatprep.subr.mxu0 0.0
        %799 = vmatpush2.msra.mxu0 0.0
        %800 = vmatprep.subr.mxu0 0.0
        %801 = vmatpush2.msra.mxu0 0.0
        %802 = vmatprep.subr.mxu0 0.0
        %803 = vmatpush2.msra.mxu0 0.0
        %804 = vmatprep.subr.mxu0 0.0
        %805 = vmatpush2.msra.mxu0 0.0
        %806 = vmatprep.subr.mxu0 0.0
        %807 = vmatpush2.msra.mxu0 0.0
        %808 = vmatprep.subr.mxu0 0.0
        %809 = vmatpush2.msra.mxu0 0.0
        %810 = vmatprep.subr.mxu0 0.0
        %811 = vmatpush2.msra.mxu0 0.0
        %812 = vmatprep.mubr.f32.mxu0 0.0
        %813 = vmatmul.mubr.f32.gmra.mxu0 %v737
        %v814 = vpop.f32.mrf.mxu0
        %v815 = vadd.f32 %v718, %v814
        %v816 = vpop.f32.mrf.mxu0
        %v817 = vadd.f32 %v718, %v816
        %818 = vmatprep.mubr.f32.mxu0 0.0
        %819 = vmatmul.mubr.f32.gmra.mxu0 %v740
        %v820 = vpop.f32.mrf.mxu0
        %v821 = vadd.f32 %v723, %v820
        %v822 = vpop.f32.mrf.mxu0
        %v823 = vadd.f32 %v723, %v822
        %824 = vmatprep.mubr.f32.mxu0 0.0
        %825 = vmatmul.mubr.f32.gmra.mxu0 %v743
        %v826 = vpop.f32.mrf.mxu0
        %v827 = vadd.f32 %v728, %v826
        %v828 = vpop.f32.mrf.mxu0
        %v829 = vadd.f32 %v728, %v828
        %830 = vmatprep.mubr.f32.mxu0 0.0
        %831 = vmatmul.mubr.f32.gmra.mxu0 %v746
        %v832 = vpop.f32.mrf.mxu0
        %v833 = vadd.f32 %v733, %v832
        %v834 = vpop.f32.mrf.mxu0
        %v835 = vadd.f32 %v733, %v834
        %836 = vdwg.mxu0
        %837 = vmatprep.subr.mxu0 0.0
        %838 = vmatpush1.msra.mxu0 0.0
        %839 = vmatprep.subr.mxu0 0.0
        %840 = vmatpush1.msra.mxu0 0.0
        %841 = vmatprep.subr.mxu0 0.0
        %842 = vmatpush1.msra.mxu0 0.0
        %843 = vmatprep.subr.mxu0 0.0
        %844 = vmatpush1.msra.mxu0 0.0
        %845 = vmatprep.subr.mxu0 0.0
        %846 = vmatpush1.msra.mxu0 0.0
        %847 = vmatprep.subr.mxu0 0.0
        %848 = vmatpush1.msra.mxu0 0.0
        %849 = vmatprep.subr.mxu0 0.0
        %850 = vmatpush1.msra.mxu0 0.0
        %851 = vmatprep.subr.mxu0 0.0
        %852 = vmatpush1.msra.mxu0 0.0
        %853 = vmatprep.subr.mxu0 0.0
        %854 = vmatpush1.msra.mxu0 0.0
        %855 = vmatprep.subr.mxu0 0.0
        %856 = vmatpush1.msra.mxu0 0.0
        %857 = vmatprep.subr.mxu0 0.0
        %858 = vmatpush1.msra.mxu0 0.0
        %859 = vmatprep.subr.mxu0 0.0
        %860 = vmatpush1.msra.mxu0 0.0
        %861 = vmatprep.subr.mxu0 %v706
        %862 = vmatpush1.msra.mxu0 %v705
        %863 = vmatprep.subr.mxu0 %v702
        %864 = vmatpush1.msra.mxu0 %v701
        %865 = vmatprep.subr.mxu0 %v698
        %866 = vmatpush1.msra.mxu0 %v697
        %867 = vmatprep.subr.mxu0 %v694
        %868 = vmatpush1.msra.mxu0 %v693
        %869 = vmatprep.subr.mxu0 0.0
        %870 = vmatpush2.msra.mxu0 0.0
        %871 = vmatprep.subr.mxu0 0.0
        %872 = vmatpush2.msra.mxu0 0.0
        %873 = vmatprep.subr.mxu0 0.0
        %874 = vmatpush2.msra.mxu0 0.0
        %875 = vmatprep.subr.mxu0 0.0
        %876 = vmatpush2.msra.mxu0 0.0
        %877 = vmatprep.subr.mxu0 0.0
        %878 = vmatpush2.msra.mxu0 0.0
        %879 = vmatprep.subr.mxu0 0.0
        %880 = vmatpush2.msra.mxu0 0.0
        %881 = vmatprep.subr.mxu0 0.0
        %882 = vmatpush2.msra.mxu0 0.0
        %883 = vmatprep.subr.mxu0 0.0
        %884 = vmatpush2.msra.mxu0 0.0
        %885 = vmatprep.subr.mxu0 0.0
        %886 = vmatpush2.msra.mxu0 0.0
        %887 = vmatprep.subr.mxu0 0.0
        %888 = vmatpush2.msra.mxu0 0.0
        %889 = vmatprep.subr.mxu0 0.0
        %890 = vmatpush2.msra.mxu0 0.0
        %891 = vmatprep.subr.mxu0 0.0
        %892 = vmatpush2.msra.mxu0 0.0
        %893 = vmatprep.subr.mxu0 0.0
        %894 = vmatpush2.msra.mxu0 0.0
        %895 = vmatprep.subr.mxu0 0.0
        %896 = vmatpush2.msra.mxu0 0.0
        %897 = vmatprep.subr.mxu0 0.0
        %898 = vmatpush2.msra.mxu0 0.0
        %899 = vmatprep.subr.mxu0 0.0
        %900 = vmatpush2.msra.mxu0 0.0
        %901 = vmatprep.mubr.f32.mxu0 0.0
        %902 = vmatmul.mubr.f32.gmra.mxu0 %v737
        %v903 = vpop.f32.mrf.mxu0
        %v904 = vadd.f32 %v718, %v903
        %v905 = vpop.f32.mrf.mxu0
        %v906 = vadd.f32 %v718, %v905
        %907 = vmatprep.mubr.f32.mxu0 0.0
        %908 = vmatmul.mubr.f32.gmra.mxu0 %v740
        %v909 = vpop.f32.mrf.mxu0
        %v910 = vadd.f32 %v723, %v909
        %v911 = vpop.f32.mrf.mxu0
        %v912 = vadd.f32 %v723, %v911
        %913 = vmatprep.mubr.f32.mxu0 0.0
        %914 = vmatmul.mubr.f32.gmra.mxu0 %v743
        %v915 = vpop.f32.mrf.mxu0
        %v916 = vadd.f32 %v728, %v915
        %v917 = vpop.f32.mrf.mxu0
        %v918 = vadd.f32 %v728, %v917
        %919 = vmatprep.mubr.f32.mxu0 0.0
        %920 = vmatmul.mubr.f32.gmra.mxu0 %v746
        %v921 = vpop.f32.mrf.mxu0
        %v922 = vadd.f32 %v733, %v921
        %v923 = vpop.f32.mrf.mxu0
        %v924 = vadd.f32 %v733, %v923
        %925 = vdwg.mxu0
        %v926 = vtanh.pop %v815
        %v927 = vtanh.pop %v817
        %v928 = vtanh.pop %v904
        %v929 = vtanh.pop %v906
        %v930 = vtanh.pop %v821
        %v931 = vtanh.pop %v823
        %v932 = vtanh.pop %v910
        %v933 = vtanh.pop %v912
        %v934 = vtanh.pop %v827
        %v935 = vtanh.pop %v829
        %v936 = vtanh.pop %v916
        %v937 = vtanh.pop %v918
        %v938 = vtanh.pop %v833
        %v939 = vtanh.pop %v835
        %v940 = vtanh.pop %v922
        %v941 = vtanh.pop %v924
        %v942 = vld [vmem:[%s5] sm:$0xff]
        %v943 = vld [vmem:[%s5 + $0x8] sm:$0xff]
        %v944 = vld [vmem:[%s5 + $0x10] sm:$0xff]
        %v945 = vld [vmem:[%s5 + $0x18] sm:$0xff]
        %v946 = vld [vmem:[%s6] sm:$0xff]
        %v947 = vld [vmem:[%s6 + $0x8] sm:$0xff]
        %v948 = vld [vmem:[%s6 + $0x10] sm:$0xff]
        %v949 = vld [vmem:[%s6 + $0x18] sm:$0xff]
        %951 = vset.pattern.permute.xlu0 0
        %952 = vperm.xlu0 %951, %v946
        %v953 = vpop.permute.xlu0 %952
        %956 = vset.pattern.permute.xlu0 0
        %957 = vperm.xlu0 %956, %v947
        %v958 = vpop.permute.xlu0 %957
        %961 = vset.pattern.permute.xlu0 0
        %962 = vperm.xlu0 %961, %v948
        %v963 = vpop.permute.xlu0 %962
        %966 = vset.pattern.permute.xlu0 0
        %967 = vperm.xlu0 %966, %v949
        %v968 = vpop.permute.xlu0 %967
        %v971 = vsel %vm735, %v942, 0
        %v974 = vsel %vm735, %v943, 0
        %v977 = vsel %vm735, %v944, 0
        %v980 = vsel %vm735, %v945, 0
        %982 = vmatprep.subr.mxu0 0.0
        %983 = vmatpush1.msra.mxu0 0.0
        %984 = vmatprep.subr.mxu0 0.0
        %985 = vmatpush1.msra.mxu0 0.0
        %986 = vmatprep.subr.mxu0 0.0
        %987 = vmatpush1.msra.mxu0 0.0
        %988 = vmatprep.subr.mxu0 0.0
        %989 = vmatpush1.msra.mxu0 0.0
        %990 = vmatprep.subr.mxu0 0.0
        %991 = vmatpush1.msra.mxu0 0.0
        %992 = vmatprep.subr.mxu0 0.0
        %993 = vmatpush1.msra.mxu0 0.0
        %994 = vmatprep.subr.mxu0 0.0
        %995 = vmatpush1.msra.mxu0 0.0
        %996 = vmatprep.subr.mxu0 0.0
        %997 = vmatpush1.msra.mxu0 0.0
        %998 = vmatprep.subr.mxu0 0.0
        %999 = vmatpush1.msra.mxu0 0.0
        %1000 = vmatprep.subr.mxu0 0.0
        %1001 = vmatpush1.msra.mxu0 0.0
        %1002 = vmatprep.subr.mxu0 0.0
        %1003 = vmatpush1.msra.mxu0 0.0
        %1004 = vmatprep.subr.mxu0 0.0
        %1005 = vmatpush1.msra.mxu0 0.0
        %1006 = vmatprep.subr.mxu0 %v939
        %1007 = vmatpush1.msra.mxu0 %v938
        %1008 = vmatprep.subr.mxu0 %v935
        %1009 = vmatpush1.msra.mxu0 %v934
        %1010 = vmatprep.subr.mxu0 %v931
        %1011 = vmatpush1.msra.mxu0 %v930
        %1012 = vmatprep.subr.mxu0 %v927
        %1013 = vmatpush1.msra.mxu0 %v926
        %1014 = vmatprep.subr.mxu0 0.0
        %1015 = vmatpush2.msra.mxu0 0.0
        %1016 = vmatprep.subr.mxu0 0.0
        %1017 = vmatpush2.msra.mxu0 0.0
        %1018 = vmatprep.subr.mxu0 0.0
        %1019 = vmatpush2.msra.mxu0 0.0
        %1020 = vmatprep.subr.mxu0 0.0
        %1021 = vmatpush2.msra.mxu0 0.0
        %1022 = vmatprep.subr.mxu0 0.0
        %1023 = vmatpush2.msra.mxu0 0.0
        %1024 = vmatprep.subr.mxu0 0.0
        %1025 = vmatpush2.msra.mxu0 0.0
        %1026 = vmatprep.subr.mxu0 0.0
        %1027 = vmatpush2.msra.mxu0 0.0
        %1028 = vmatprep.subr.mxu0 0.0
        %1029 = vmatpush2.msra.mxu0 0.0
        %1030 = vmatprep.subr.mxu0 0.0
        %1031 = vmatpush2.msra.mxu0 0.0
        %1032 = vmatprep.subr.mxu0 0.0
        %1033 = vmatpush2.msra.mxu0 0.0
        %1034 = vmatprep.subr.mxu0 0.0
        %1035 = vmatpush2.msra.mxu0 0.0
        %1036 = vmatprep.subr.mxu0 0.0
        %1037 = vmatpush2.msra.mxu0 0.0
        %1038 = vmatprep.subr.mxu0 0.0
        %1039 = vmatpush2.msra.mxu0 0.0
        %1040 = vmatprep.subr.mxu0 0.0
        %1041 = vmatpush2.msra.mxu0 0.0
        %1042 = vmatprep.subr.mxu0 0.0
        %1043 = vmatpush2.msra.mxu0 0.0
        %1044 = vmatprep.subr.mxu0 0.0
        %1045 = vmatpush2.msra.mxu0 0.0
        %1046 = vmatprep.mubr.f32.mxu0 0.0
        %1047 = vmatmul.mubr.f32.gmra.mxu0 %v971
        %v1048 = vpop.f32.mrf.mxu0
        %v1049 = vadd.f32 %v953, %v1048
        %v1050 = vpop.f32.mrf.mxu0
        %v1051 = vadd.f32 %v953, %v1050
        %1052 = vmatprep.mubr.f32.mxu0 0.0
        %1053 = vmatmul.mubr.f32.gmra.mxu0 %v974
        %v1054 = vpop.f32.mrf.mxu0
        %v1055 = vadd.f32 %v958, %v1054
        %v1056 = vpop.f32.mrf.mxu0
        %v1057 = vadd.f32 %v958, %v1056
        %1058 = vmatprep.mubr.f32.mxu0 0.0
        %1059 = vmatmul.mubr.f32.gmra.mxu0 %v977
        %v1060 = vpop.f32.mrf.mxu0
        %v1061 = vadd.f32 %v963, %v1060
        %v1062 = vpop.f32.mrf.mxu0
        %v1063 = vadd.f32 %v963, %v1062
        %1064 = vmatprep.mubr.f32.mxu0 0.0
        %1065 = vmatmul.mubr.f32.gmra.mxu0 %v980
        %v1066 = vpop.f32.mrf.mxu0
        %v1067 = vadd.f32 %v968, %v1066
        %v1068 = vpop.f32.mrf.mxu0
        %v1069 = vadd.f32 %v968, %v1068
        %1070 = vdwg.mxu0
        %1071 = vmatprep.subr.mxu0 0.0
        %1072 = vmatpush1.msra.mxu0 0.0
        %1073 = vmatprep.subr.mxu0 0.0
        %1074 = vmatpush1.msra.mxu0 0.0
        %1075 = vmatprep.subr.mxu0 0.0
        %1076 = vmatpush1.msra.mxu0 0.0
        %1077 = vmatprep.subr.mxu0 0.0
        %1078 = vmatpush1.msra.mxu0 0.0
        %1079 = vmatprep.subr.mxu0 0.0
        %1080 = vmatpush1.msra.mxu0 0.0
        %1081 = vmatprep.subr.mxu0 0.0
        %1082 = vmatpush1.msra.mxu0 0.0
        %1083 = vmatprep.subr.mxu0 0.0
        %1084 = vmatpush1.msra.mxu0 0.0
        %1085 = vmatprep.subr.mxu0 0.0
        %1086 = vmatpush1.msra.mxu0 0.0
        %1087 = vmatprep.subr.mxu0 0.0
        %1088 = vmatpush1.msra.mxu0 0.0
        %1089 = vmatprep.subr.mxu0 0.0
        %1090 = vmatpush1.msra.mxu0 0.0
        %1091 = vmatprep.subr.mxu0 0.0
        %1092 = vmatpush1.msra.mxu0 0.0
        %1093 = vmatprep.subr.mxu0 0.0
        %1094 = vmatpush1.msra.mxu0 0.0
        %1095 = vmatprep.subr.mxu0 %v941
        %1096 = vmatpush1.msra.mxu0 %v940
        %1097 = vmatprep.subr.mxu0 %v937
        %1098 = vmatpush1.msra.mxu0 %v936
        %1099 = vmatprep.subr.mxu0 %v933
        %1100 = vmatpush1.msra.mxu0 %v932
        %1101 = vmatprep.subr.mxu0 %v929
        %1102 = vmatpush1.msra.mxu0 %v928
        %1103 = vmatprep.subr.mxu0 0.0
        %1104 = vmatpush2.msra.mxu0 0.0
        %1105 = vmatprep.subr.mxu0 0.0
        %1106 = vmatpush2.msra.mxu0 0.0
        %1107 = vmatprep.subr.mxu0 0.0
        %1108 = vmatpush2.msra.mxu0 0.0
        %1109 = vmatprep.subr.mxu0 0.0
        %1110 = vmatpush2.msra.mxu0 0.0
        %1111 = vmatprep.subr.mxu0 0.0
        %1112 = vmatpush2.msra.mxu0 0.0
        %1113 = vmatprep.subr.mxu0 0.0
        %1114 = vmatpush2.msra.mxu0 0.0
        %1115 = vmatprep.subr.mxu0 0.0
        %1116 = vmatpush2.msra.mxu0 0.0
        %1117 = vmatprep.subr.mxu0 0.0
        %1118 = vmatpush2.msra.mxu0 0.0
        %1119 = vmatprep.subr.mxu0 0.0
        %1120 = vmatpush2.msra.mxu0 0.0
        %1121 = vmatprep.subr.mxu0 0.0
        %1122 = vmatpush2.msra.mxu0 0.0
        %1123 = vmatprep.subr.mxu0 0.0
        %1124 = vmatpush2.msra.mxu0 0.0
        %1125 = vmatprep.subr.mxu0 0.0
        %1126 = vmatpush2.msra.mxu0 0.0
        %1127 = vmatprep.subr.mxu0 0.0
        %1128 = vmatpush2.msra.mxu0 0.0
        %1129 = vmatprep.subr.mxu0 0.0
        %1130 = vmatpush2.msra.mxu0 0.0
        %1131 = vmatprep.subr.mxu0 0.0
        %1132 = vmatpush2.msra.mxu0 0.0
        %1133 = vmatprep.subr.mxu0 0.0
        %1134 = vmatpush2.msra.mxu0 0.0
        %1135 = vmatprep.mubr.f32.mxu0 0.0
        %1136 = vmatmul.mubr.f32.gmra.mxu0 %v971
        %v1137 = vpop.f32.mrf.mxu0
        %v1138 = vadd.f32 %v953, %v1137
        %v1139 = vpop.f32.mrf.mxu0
        %v1140 = vadd.f32 %v953, %v1139
        %1141 = vmatprep.mubr.f32.mxu0 0.0
        %1142 = vmatmul.mubr.f32.gmra.mxu0 %v974
        %v1143 = vpop.f32.mrf.mxu0
        %v1144 = vadd.f32 %v958, %v1143
        %v1145 = vpop.f32.mrf.mxu0
        %v1146 = vadd.f32 %v958, %v1145
        %1147 = vmatprep.mubr.f32.mxu0 0.0
        %1148 = vmatmul.mubr.f32.gmra.mxu0 %v977
        %v1149 = vpop.f32.mrf.mxu0
        %v1150 = vadd.f32 %v963, %v1149
        %v1151 = vpop.f32.mrf.mxu0
        %v1152 = vadd.f32 %v963, %v1151
        %1153 = vmatprep.mubr.f32.mxu0 0.0
        %1154 = vmatmul.mubr.f32.gmra.mxu0 %v980
        %v1155 = vpop.f32.mrf.mxu0
        %v1156 = vadd.f32 %v968, %v1155
        %v1157 = vpop.f32.mrf.mxu0
        %v1158 = vadd.f32 %v968, %v1157
        %1159 = vdwg.mxu0
        %v1160 = vmax.f32 %v1049, 0.0
        %v1161 = vmax.f32 %v1051, 0.0
        %v1162 = vmax.f32 %v1138, 0.0
        %v1163 = vmax.f32 %v1140, 0.0
        %v1164 = vmax.f32 %v1055, 0.0
        %v1165 = vmax.f32 %v1057, 0.0
        %v1166 = vmax.f32 %v1144, 0.0
        %v1167 = vmax.f32 %v1146, 0.0
        %v1168 = vmax.f32 %v1061, 0.0
        %v1169 = vmax.f32 %v1063, 0.0
        %v1170 = vmax.f32 %v1150, 0.0
        %v1171 = vmax.f32 %v1152, 0.0
        %v1172 = vmax.f32 %v1067, 0.0
        %v1173 = vmax.f32 %v1069, 0.0
        %v1174 = vmax.f32 %v1156, 0.0
        %v1175 = vmax.f32 %v1158, 0.0
        %v1176 = vld [vmem:[%s7] sm:$0xff]
        %v1177 = vld [vmem:[%s7 + $0x8] sm:$0xff]
        %v1178 = vld [vmem:[%s7 + $0x10] sm:$0xff]
        %v1179 = vld [vmem:[%s7 + $0x18] sm:$0xff]
        %v1180 = vld [vmem:[%s8] sm:$0xff]
        %v1181 = vld [vmem:[%s8 + $0x8] sm:$0xff]
        %v1182 = vld [vmem:[%s8 + $0x10] sm:$0xff]
        %v1183 = vld [vmem:[%s8 + $0x18] sm:$0xff]
        %1185 = vset.pattern.permute.xlu0 0
        %1186 = vperm.xlu0 %1185, %v1180
        %v1187 = vpop.permute.xlu0 %1186
        %1190 = vset.pattern.permute.xlu0 0
        %1191 = vperm.xlu0 %1190, %v1181
        %v1192 = vpop.permute.xlu0 %1191
        %1195 = vset.pattern.permute.xlu0 0
        %1196 = vperm.xlu0 %1195, %v1182
        %v1197 = vpop.permute.xlu0 %1196
        %1200 = vset.pattern.permute.xlu0 0
        %1201 = vperm.xlu0 %1200, %v1183
        %v1202 = vpop.permute.xlu0 %1201
        %v1205 = vsel %vm735, %v1176, 0
        %v1208 = vsel %vm735, %v1177, 0
        %v1211 = vsel %vm735, %v1178, 0
        %v1214 = vsel %vm735, %v1179, 0
        %1216 = vmatprep.subr.mxu0 0.0
        %1217 = vmatpush1.msra.mxu0 0.0
        %1218 = vmatprep.subr.mxu0 0.0
        %1219 = vmatpush1.msra.mxu0 0.0
        %1220 = vmatprep.subr.mxu0 0.0
        %1221 = vmatpush1.msra.mxu0 0.0
        %1222 = vmatprep.subr.mxu0 0.0
        %1223 = vmatpush1.msra.mxu0 0.0
        %1224 = vmatprep.subr.mxu0 0.0
        %1225 = vmatpush1.msra.mxu0 0.0
        %1226 = vmatprep.subr.mxu0 0.0
        %1227 = vmatpush1.msra.mxu0 0.0
        %1228 = vmatprep.subr.mxu0 0.0
        %1229 = vmatpush1.msra.mxu0 0.0
        %1230 = vmatprep.subr.mxu0 0.0
        %1231 = vmatpush1.msra.mxu0 0.0
        %1232 = vmatprep.subr.mxu0 0.0
        %1233 = vmatpush1.msra.mxu0 0.0
        %1234 = vmatprep.subr.mxu0 0.0
        %1235 = vmatpush1.msra.mxu0 0.0
        %1236 = vmatprep.subr.mxu0 0.0
        %1237 = vmatpush1.msra.mxu0 0.0
        %1238 = vmatprep.subr.mxu0 0.0
        %1239 = vmatpush1.msra.mxu0 0.0
        %1240 = vmatprep.subr.mxu0 %v1173
        %1241 = vmatpush1.msra.mxu0 %v1172
        %1242 = vmatprep.subr.mxu0 %v1169
        %1243 = vmatpush1.msra.mxu0 %v1168
        %1244 = vmatprep.subr.mxu0 %v1165
        %1245 = vmatpush1.msra.mxu0 %v1164
        %1246 = vmatprep.subr.mxu0 %v1161
        %1247 = vmatpush1.msra.mxu0 %v1160
        %1248 = vmatprep.subr.mxu0 0.0
        %1249 = vmatpush2.msra.mxu0 0.0
        %1250 = vmatprep.subr.mxu0 0.0
        %1251 = vmatpush2.msra.mxu0 0.0
        %1252 = vmatprep.subr.mxu0 0.0
        %1253 = vmatpush2.msra.mxu0 0.0
        %1254 = vmatprep.subr.mxu0 0.0
        %1255 = vmatpush2.msra.mxu0 0.0
        %1256 = vmatprep.subr.mxu0 0.0
        %1257 = vmatpush2.msra.mxu0 0.0
        %1258 = vmatprep.subr.mxu0 0.0
        %1259 = vmatpush2.msra.mxu0 0.0
        %1260 = vmatprep.subr.mxu0 0.0
        %1261 = vmatpush2.msra.mxu0 0.0
        %1262 = vmatprep.subr.mxu0 0.0
        %1263 = vmatpush2.msra.mxu0 0.0
        %1264 = vmatprep.subr.mxu0 0.0
        %1265 = vmatpush2.msra.mxu0 0.0
        %1266 = vmatprep.subr.mxu0 0.0
        %1267 = vmatpush2.msra.mxu0 0.0
        %1268 = vmatprep.subr.mxu0 0.0
        %1269 = vmatpush2.msra.mxu0 0.0
        %1270 = vmatprep.subr.mxu0 0.0
        %1271 = vmatpush2.msra.mxu0 0.0
        %1272 = vmatprep.subr.mxu0 0.0
        %1273 = vmatpush2.msra.mxu0 0.0
        %1274 = vmatprep.subr.mxu0 0.0
        %1275 = vmatpush2.msra.mxu0 0.0
        %1276 = vmatprep.subr.mxu0 0.0
        %1277 = vmatpush2.msra.mxu0 0.0
        %1278 = vmatprep.subr.mxu0 0.0
        %1279 = vmatpush2.msra.mxu0 0.0
        %1280 = vmatprep.mubr.f32.mxu0 0.0
        %1281 = vmatmul.mubr.f32.gmra.mxu0 %v1205
        %v1282 = vpop.f32.mrf.mxu0
        %v1283 = vadd.f32 %v1187, %v1282
        %v1284 = vpop.f32.mrf.mxu0
        %v1285 = vadd.f32 %v1187, %v1284
        %1286 = vmatprep.mubr.f32.mxu0 0.0
        %1287 = vmatmul.mubr.f32.gmra.mxu0 %v1208
        %v1288 = vpop.f32.mrf.mxu0
        %v1289 = vadd.f32 %v1192, %v1288
        %v1290 = vpop.f32.mrf.mxu0
        %v1291 = vadd.f32 %v1192, %v1290
        %1292 = vmatprep.mubr.f32.mxu0 0.0
        %1293 = vmatmul.mubr.f32.gmra.mxu0 %v1211
        %v1294 = vpop.f32.mrf.mxu0
        %v1295 = vadd.f32 %v1197, %v1294
        %v1296 = vpop.f32.mrf.mxu0
        %v1297 = vadd.f32 %v1197, %v1296
        %1298 = vmatprep.mubr.f32.mxu0 0.0
        %1299 = vmatmul.mubr.f32.gmra.mxu0 %v1214
        %v1300 = vpop.f32.mrf.mxu0
        %v1301 = vadd.f32 %v1202, %v1300
        %v1302 = vpop.f32.mrf.mxu0
        %v1303 = vadd.f32 %v1202, %v1302
        %1304 = vdwg.mxu0
        %1305 = vmatprep.subr.mxu0 0.0
        %1306 = vmatpush1.msra.mxu0 0.0
        %1307 = vmatprep.subr.mxu0 0.0
        %1308 = vmatpush1.msra.mxu0 0.0
        %1309 = vmatprep.subr.mxu0 0.0
        %1310 = vmatpush1.msra.mxu0 0.0
        %1311 = vmatprep.subr.mxu0 0.0
        %1312 = vmatpush1.msra.mxu0 0.0
        %1313 = vmatprep.subr.mxu0 0.0
        %1314 = vmatpush1.msra.mxu0 0.0
        %1315 = vmatprep.subr.mxu0 0.0
        %1316 = vmatpush1.msra.mxu0 0.0
        %1317 = vmatprep.subr.mxu0 0.0
        %1318 = vmatpush1.msra.mxu0 0.0
        %1319 = vmatprep.subr.mxu0 0.0
        %1320 = vmatpush1.msra.mxu0 0.0
        %1321 = vmatprep.subr.mxu0 0.0
        %1322 = vmatpush1.msra.mxu0 0.0
        %1323 = vmatprep.subr.mxu0 0.0
        %1324 = vmatpush1.msra.mxu0 0.0
        %1325 = vmatprep.subr.mxu0 0.0
        %1326 = vmatpush1.msra.mxu0 0.0
        %1327 = vmatprep.subr.mxu0 0.0
        %1328 = vmatpush1.msra.mxu0 0.0
        %1329 = vmatprep.subr.mxu0 %v1175
        %1330 = vmatpush1.msra.mxu0 %v1174
        %1331 = vmatprep.subr.mxu0 %v1171
        %1332 = vmatpush1.msra.mxu0 %v1170
        %1333 = vmatprep.subr.mxu0 %v1167
        %1334 = vmatpush1.msra.mxu0 %v1166
        %1335 = vmatprep.subr.mxu0 %v1163
        %1336 = vmatpush1.msra.mxu0 %v1162
        %1337 = vmatprep.subr.mxu0 0.0
        %1338 = vmatpush2.msra.mxu0 0.0
        %1339 = vmatprep.subr.mxu0 0.0
        %1340 = vmatpush2.msra.mxu0 0.0
        %1341 = vmatprep.subr.mxu0 0.0
        %1342 = vmatpush2.msra.mxu0 0.0
        %1343 = vmatprep.subr.mxu0 0.0
        %1344 = vmatpush2.msra.mxu0 0.0
        %1345 = vmatprep.subr.mxu0 0.0
        %1346 = vmatpush2.msra.mxu0 0.0
        %1347 = vmatprep.subr.mxu0 0.0
        %1348 = vmatpush2.msra.mxu0 0.0
        %1349 = vmatprep.subr.mxu0 0.0
        %1350 = vmatpush2.msra.mxu0 0.0
        %1351 = vmatprep.subr.mxu0 0.0
        %1352 = vmatpush2.msra.mxu0 0.0
        %1353 = vmatprep.subr.mxu0 0.0
        %1354 = vmatpush2.msra.mxu0 0.0
        %1355 = vmatprep.subr.mxu0 0.0
        %1356 = vmatpush2.msra.mxu0 0.0
        %1357 = vmatprep.subr.mxu0 0.0
        %1358 = vmatpush2.msra.mxu0 0.0
        %1359 = vmatprep.subr.mxu0 0.0
        %1360 = vmatpush2.msra.mxu0 0.0
        %1361 = vmatprep.subr.mxu0 0.0
        %1362 = vmatpush2.msra.mxu0 0.0
        %1363 = vmatprep.subr.mxu0 0.0
        %1364 = vmatpush2.msra.mxu0 0.0
        %1365 = vmatprep.subr.mxu0 0.0
        %1366 = vmatpush2.msra.mxu0 0.0
        %1367 = vmatprep.subr.mxu0 0.0
        %1368 = vmatpush2.msra.mxu0 0.0
        %1369 = vmatprep.mubr.f32.mxu0 0.0
        %1370 = vmatmul.mubr.f32.gmra.mxu0 %v1205
        %v1371 = vpop.f32.mrf.mxu0
        %v1372 = vadd.f32 %v1187, %v1371
        %v1373 = vpop.f32.mrf.mxu0
        %v1374 = vadd.f32 %v1187, %v1373
        %1375 = vmatprep.mubr.f32.mxu0 0.0
        %1376 = vmatmul.mubr.f32.gmra.mxu0 %v1208
        %v1377 = vpop.f32.mrf.mxu0
        %v1378 = vadd.f32 %v1192, %v1377
        %v1379 = vpop.f32.mrf.mxu0
        %v1380 = vadd.f32 %v1192, %v1379
        %1381 = vmatprep.mubr.f32.mxu0 0.0
        %1382 = vmatmul.mubr.f32.gmra.mxu0 %v1211
        %v1383 = vpop.f32.mrf.mxu0
        %v1384 = vadd.f32 %v1197, %v1383
        %v1385 = vpop.f32.mrf.mxu0
        %v1386 = vadd.f32 %v1197, %v1385
        %1387 = vmatprep.mubr.f32.mxu0 0.0
        %1388 = vmatmul.mubr.f32.gmra.mxu0 %v1214
        %v1389 = vpop.f32.mrf.mxu0
        %v1390 = vadd.f32 %v1202, %v1389
        %v1391 = vpop.f32.mrf.mxu0
        %v1392 = vadd.f32 %v1202, %v1391
        %1393 = vdwg.mxu0
        %v1394 = vmax.f32 %v1283, 0.0
        %v1395 = vmax.f32 %v1285, 0.0
        %v1396 = vmax.f32 %v1372, 0.0
        %v1397 = vmax.f32 %v1374, 0.0
        %v1398 = vmax.f32 %v1289, 0.0
        %v1399 = vmax.f32 %v1291, 0.0
        %v1400 = vmax.f32 %v1378, 0.0
        %v1401 = vmax.f32 %v1380, 0.0
        %v1402 = vmax.f32 %v1295, 0.0
        %v1403 = vmax.f32 %v1297, 0.0
        %v1404 = vmax.f32 %v1384, 0.0
        %v1405 = vmax.f32 %v1386, 0.0
        %v1406 = vmax.f32 %v1301, 0.0
        %v1407 = vmax.f32 %v1303, 0.0
        %v1408 = vmax.f32 %v1390, 0.0
        %v1409 = vmax.f32 %v1392, 0.0
        %v1410 = vld [vmem:[%s9] sm:$0xff]
        %v1411 = vld [vmem:[%s9 + $0x8] sm:$0xff]
        %v1412 = vld [vmem:[%s9 + $0x10] sm:$0xff]
        %v1413 = vld [vmem:[%s9 + $0x18] sm:$0xff]
        %v1414 = vld [vmem:[%s10] sm:$0xff]
        %v1415 = vld [vmem:[%s10 + $0x8] sm:$0xff]
        %v1416 = vld [vmem:[%s10 + $0x10] sm:$0xff]
        %v1417 = vld [vmem:[%s10 + $0x18] sm:$0xff]
        %1419 = vset.pattern.permute.xlu0 0
        %1420 = vperm.xlu0 %1419, %v1414
        %v1421 = vpop.permute.xlu0 %1420
        %1424 = vset.pattern.permute.xlu0 0
        %1425 = vperm.xlu0 %1424, %v1415
        %v1426 = vpop.permute.xlu0 %1425
        %1429 = vset.pattern.permute.xlu0 0
        %1430 = vperm.xlu0 %1429, %v1416
        %v1431 = vpop.permute.xlu0 %1430
        %1434 = vset.pattern.permute.xlu0 0
        %1435 = vperm.xlu0 %1434, %v1417
        %v1436 = vpop.permute.xlu0 %1435
        %v1439 = vsel %vm735, %v1410, 0
        %v1442 = vsel %vm735, %v1411, 0
        %v1445 = vsel %vm735, %v1412, 0
        %v1448 = vsel %vm735, %v1413, 0
        %1450 = vmatprep.subr.mxu0 0.0
        %1451 = vmatpush1.msra.mxu0 0.0
        %1452 = vmatprep.subr.mxu0 0.0
        %1453 = vmatpush1.msra.mxu0 0.0
        %1454 = vmatprep.subr.mxu0 0.0
        %1455 = vmatpush1.msra.mxu0 0.0
        %1456 = vmatprep.subr.mxu0 0.0
        %1457 = vmatpush1.msra.mxu0 0.0
        %1458 = vmatprep.subr.mxu0 0.0
        %1459 = vmatpush1.msra.mxu0 0.0
        %1460 = vmatprep.subr.mxu0 0.0
        %1461 = vmatpush1.msra.mxu0 0.0
        %1462 = vmatprep.subr.mxu0 0.0
        %1463 = vmatpush1.msra.mxu0 0.0
        %1464 = vmatprep.subr.mxu0 0.0
        %1465 = vmatpush1.msra.mxu0 0.0
        %1466 = vmatprep.subr.mxu0 0.0
        %1467 = vmatpush1.msra.mxu0 0.0
        %1468 = vmatprep.subr.mxu0 0.0
        %1469 = vmatpush1.msra.mxu0 0.0
        %1470 = vmatprep.subr.mxu0 0.0
        %1471 = vmatpush1.msra.mxu0 0.0
        %1472 = vmatprep.subr.mxu0 0.0
        %1473 = vmatpush1.msra.mxu0 0.0
        %1474 = vmatprep.subr.mxu0 %v1407
        %1475 = vmatpush1.msra.mxu0 %v1406
        %1476 = vmatprep.subr.mxu0 %v1403
        %1477 = vmatpush1.msra.mxu0 %v1402
        %1478 = vmatprep.subr.mxu0 %v1399
        %1479 = vmatpush1.msra.mxu0 %v1398
        %1480 = vmatprep.subr.mxu0 %v1395
        %1481 = vmatpush1.msra.mxu0 %v1394
        %1482 = vmatprep.subr.mxu0 0.0
        %1483 = vmatpush2.msra.mxu0 0.0
        %1484 = vmatprep.subr.mxu0 0.0
        %1485 = vmatpush2.msra.mxu0 0.0
        %1486 = vmatprep.subr.mxu0 0.0
        %1487 = vmatpush2.msra.mxu0 0.0
        %1488 = vmatprep.subr.mxu0 0.0
        %1489 = vmatpush2.msra.mxu0 0.0
        %1490 = vmatprep.subr.mxu0 0.0
        %1491 = vmatpush2.msra.mxu0 0.0
        %1492 = vmatprep.subr.mxu0 0.0
        %1493 = vmatpush2.msra.mxu0 0.0
        %1494 = vmatprep.subr.mxu0 0.0
        %1495 = vmatpush2.msra.mxu0 0.0
        %1496 = vmatprep.subr.mxu0 0.0
        %1497 = vmatpush2.msra.mxu0 0.0
        %1498 = vmatprep.subr.mxu0 0.0
        %1499 = vmatpush2.msra.mxu0 0.0
        %1500 = vmatprep.subr.mxu0 0.0
        %1501 = vmatpush2.msra.mxu0 0.0
        %1502 = vmatprep.subr.mxu0 0.0
        %1503 = vmatpush2.msra.mxu0 0.0
        %1504 = vmatprep.subr.mxu0 0.0
        %1505 = vmatpush2.msra.mxu0 0.0
        %1506 = vmatprep.subr.mxu0 0.0
        %1507 = vmatpush2.msra.mxu0 0.0
        %1508 = vmatprep.subr.mxu0 0.0
        %1509 = vmatpush2.msra.mxu0 0.0
        %1510 = vmatprep.subr.mxu0 0.0
        %1511 = vmatpush2.msra.mxu0 0.0
        %1512 = vmatprep.subr.mxu0 0.0
        %1513 = vmatpush2.msra.mxu0 0.0
        %1514 = vmatprep.mubr.f32.mxu0 0.0
        %1515 = vmatmul.mubr.f32.gmra.mxu0 %v1439
        %v1516 = vpop.f32.mrf.mxu0
        %v1517 = vadd.f32 %v1421, %v1516
        %v1518 = vpop.f32.mrf.mxu0
        %v1519 = vadd.f32 %v1421, %v1518
        %1520 = vmatprep.mubr.f32.mxu0 0.0
        %1521 = vmatmul.mubr.f32.gmra.mxu0 %v1442
        %v1522 = vpop.f32.mrf.mxu0
        %v1523 = vadd.f32 %v1426, %v1522
        %v1524 = vpop.f32.mrf.mxu0
        %v1525 = vadd.f32 %v1426, %v1524
        %1526 = vmatprep.mubr.f32.mxu0 0.0
        %1527 = vmatmul.mubr.f32.gmra.mxu0 %v1445
        %v1528 = vpop.f32.mrf.mxu0
        %v1529 = vadd.f32 %v1431, %v1528
        %v1530 = vpop.f32.mrf.mxu0
        %v1531 = vadd.f32 %v1431, %v1530
        %1532 = vmatprep.mubr.f32.mxu0 0.0
        %1533 = vmatmul.mubr.f32.gmra.mxu0 %v1448
        %v1534 = vpop.f32.mrf.mxu0
        %v1535 = vadd.f32 %v1436, %v1534
        %v1536 = vpop.f32.mrf.mxu0
        %v1537 = vadd.f32 %v1436, %v1536
        %1538 = vdwg.mxu0
        %1539 = vmatprep.subr.mxu0 0.0
        %1540 = vmatpush1.msra.mxu0 0.0
        %1541 = vmatprep.subr.mxu0 0.0
        %1542 = vmatpush1.msra.mxu0 0.0
        %1543 = vmatprep.subr.mxu0 0.0
        %1544 = vmatpush1.msra.mxu0 0.0
        %1545 = vmatprep.subr.mxu0 0.0
        %1546 = vmatpush1.msra.mxu0 0.0
        %1547 = vmatprep.subr.mxu0 0.0
        %1548 = vmatpush1.msra.mxu0 0.0
        %1549 = vmatprep.subr.mxu0 0.0
        %1550 = vmatpush1.msra.mxu0 0.0
        %1551 = vmatprep.subr.mxu0 0.0
        %1552 = vmatpush1.msra.mxu0 0.0
        %1553 = vmatprep.subr.mxu0 0.0
        %1554 = vmatpush1.msra.mxu0 0.0
        %1555 = vmatprep.subr.mxu0 0.0
        %1556 = vmatpush1.msra.mxu0 0.0
        %1557 = vmatprep.subr.mxu0 0.0
        %1558 = vmatpush1.msra.mxu0 0.0
        %1559 = vmatprep.subr.mxu0 0.0
        %1560 = vmatpush1.msra.mxu0 0.0
        %1561 = vmatprep.subr.mxu0 0.0
        %1562 = vmatpush1.msra.mxu0 0.0
        %1563 = vmatprep.subr.mxu0 %v1409
        %1564 = vmatpush1.msra.mxu0 %v1408
        %1565 = vmatprep.subr.mxu0 %v1405
        %1566 = vmatpush1.msra.mxu0 %v1404
        %1567 = vmatprep.subr.mxu0 %v1401
        %1568 = vmatpush1.msra.mxu0 %v1400
        %1569 = vmatprep.subr.mxu0 %v1397
        %1570 = vmatpush1.msra.mxu0 %v1396
        %1571 = vmatprep.subr.mxu0 0.0
        %1572 = vmatpush2.msra.mxu0 0.0
        %1573 = vmatprep.subr.mxu0 0.0
        %1574 = vmatpush2.msra.mxu0 0.0
        %1575 = vmatprep.subr.mxu0 0.0
        %1576 = vmatpush2.msra.mxu0 0.0
        %1577 = vmatprep.subr.mxu0 0.0
        %1578 = vmatpush2.msra.mxu0 0.0
        %1579 = vmatprep.subr.mxu0 0.0
        %1580 = vmatpush2.msra.mxu0 0.0
        %1581 = vmatprep.subr.mxu0 0.0
        %1582 = vmatpush2.msra.mxu0 0.0
        %1583 = vmatprep.subr.mxu0 0.0
        %1584 = vmatpush2.msra.mxu0 0.0
        %1585 = vmatprep.subr.mxu0 0.0
        %1586 = vmatpush2.msra.mxu0 0.0
        %1587 = vmatprep.subr.mxu0 0.0
        %1588 = vmatpush2.msra.mxu0 0.0
        %1589 = vmatprep.subr.mxu0 0.0
        %1590 = vmatpush2.msra.mxu0 0.0
        %1591 = vmatprep.subr.mxu0 0.0
        %1592 = vmatpush2.msra.mxu0 0.0
        %1593 = vmatprep.subr.mxu0 0.0
        %1594 = vmatpush2.msra.mxu0 0.0
        %1595 = vmatprep.subr.mxu0 0.0
        %1596 = vmatpush2.msra.mxu0 0.0
        %1597 = vmatprep.subr.mxu0 0.0
        %1598 = vmatpush2.msra.mxu0 0.0
        %1599 = vmatprep.subr.mxu0 0.0
        %1600 = vmatpush2.msra.mxu0 0.0
        %1601 = vmatprep.subr.mxu0 0.0
        %1602 = vmatpush2.msra.mxu0 0.0
        %1603 = vmatprep.mubr.f32.mxu0 0.0
        %1604 = vmatmul.mubr.f32.gmra.mxu0 %v1439
        %v1605 = vpop.f32.mrf.mxu0
        %v1606 = vadd.f32 %v1421, %v1605
        %v1607 = vpop.f32.mrf.mxu0
        %v1608 = vadd.f32 %v1421, %v1607
        %1609 = vmatprep.mubr.f32.mxu0 0.0
        %1610 = vmatmul.mubr.f32.gmra.mxu0 %v1442
        %v1611 = vpop.f32.mrf.mxu0
        %v1612 = vadd.f32 %v1426, %v1611
        %v1613 = vpop.f32.mrf.mxu0
        %v1614 = vadd.f32 %v1426, %v1613
        %1615 = vmatprep.mubr.f32.mxu0 0.0
        %1616 = vmatmul.mubr.f32.gmra.mxu0 %v1445
        %v1617 = vpop.f32.mrf.mxu0
        %v1618 = vadd.f32 %v1431, %v1617
        %v1619 = vpop.f32.mrf.mxu0
        %v1620 = vadd.f32 %v1431, %v1619
        %1621 = vmatprep.mubr.f32.mxu0 0.0
        %1622 = vmatmul.mubr.f32.gmra.mxu0 %v1448
        %v1623 = vpop.f32.mrf.mxu0
        %v1624 = vadd.f32 %v1436, %v1623
        %v1625 = vpop.f32.mrf.mxu0
        %v1626 = vadd.f32 %v1436, %v1625
        %1627 = vdwg.mxu0
        %v1628 = vtanh.pop %v1517
        %v1629 = vtanh.pop %v1519
        %v1630 = vtanh.pop %v1606
        %v1631 = vtanh.pop %v1608
        %v1632 = vtanh.pop %v1523
        %v1633 = vtanh.pop %v1525
        %v1634 = vtanh.pop %v1612
        %v1635 = vtanh.pop %v1614
        %v1636 = vtanh.pop %v1529
        %v1637 = vtanh.pop %v1531
        %v1638 = vtanh.pop %v1618
        %v1639 = vtanh.pop %v1620
        %v1640 = vtanh.pop %v1535
        %v1641 = vtanh.pop %v1537
        %v1642 = vtanh.pop %v1624
        %v1643 = vtanh.pop %v1626
        %v1644 = vld [vmem:[%s11] sm:$0x1]
        %v1645 = vld [vmem:[#allocation2] sm:$0x1]
        %1647 = vset.pattern.permute.xlu0 0
        %1648 = vperm.xlu0 %1647, %v1645
        %v1649 = vpop.permute.xlu0 %1648
        %v1651 = vlaneseq
        %v1652 = vshrl.u32 %v1651, 7
        %v1653 = vsub.s32 0, %v1652
        %v1654 = vrot.slane %v1649, %v1653
        %v1656 = vsel %vm735, %v1644, 0
        %1658 = vmatprep.subr.mxu0 0.0
        %1659 = vmatpush1.msra.mxu0 0.0
        %1660 = vmatprep.subr.mxu0 0.0
        %1661 = vmatpush1.msra.mxu0 0.0
        %1662 = vmatprep.subr.mxu0 0.0
        %1663 = vmatpush1.msra.mxu0 0.0
        %1664 = vmatprep.subr.mxu0 0.0
        %1665 = vmatpush1.msra.mxu0 0.0
        %1666 = vmatprep.subr.mxu0 0.0
        %1667 = vmatpush1.msra.mxu0 0.0
        %1668 = vmatprep.subr.mxu0 0.0
        %1669 = vmatpush1.msra.mxu0 0.0
        %1670 = vmatprep.subr.mxu0 0.0
        %1671 = vmatpush1.msra.mxu0 0.0
        %1672 = vmatprep.subr.mxu0 0.0
        %1673 = vmatpush1.msra.mxu0 0.0
        %1674 = vmatprep.subr.mxu0 0.0
        %1675 = vmatpush1.msra.mxu0 0.0
        %1676 = vmatprep.subr.mxu0 0.0
        %1677 = vmatpush1.msra.mxu0 0.0
        %1678 = vmatprep.subr.mxu0 0.0
        %1679 = vmatpush1.msra.mxu0 0.0
        %1680 = vmatprep.subr.mxu0 0.0
        %1681 = vmatpush1.msra.mxu0 0.0
        %1682 = vmatprep.subr.mxu0 %v1641
        %1683 = vmatpush1.msra.mxu0 %v1640
        %1684 = vmatprep.subr.mxu0 %v1637
        %1685 = vmatpush1.msra.mxu0 %v1636
        %1686 = vmatprep.subr.mxu0 %v1633
        %1687 = vmatpush1.msra.mxu0 %v1632
        %1688 = vmatprep.subr.mxu0 %v1629
        %1689 = vmatpush1.msra.mxu0 %v1628
        %1690 = vmatprep.subr.mxu0 0.0
        %1691 = vmatpush2.msra.mxu0 0.0
        %1692 = vmatprep.subr.mxu0 0.0
        %1693 = vmatpush2.msra.mxu0 0.0
        %1694 = vmatprep.subr.mxu0 0.0
        %1695 = vmatpush2.msra.mxu0 0.0
        %1696 = vmatprep.subr.mxu0 0.0
        %1697 = vmatpush2.msra.mxu0 0.0
        %1698 = vmatprep.subr.mxu0 0.0
        %1699 = vmatpush2.msra.mxu0 0.0
        %1700 = vmatprep.subr.mxu0 0.0
        %1701 = vmatpush2.msra.mxu0 0.0
        %1702 = vmatprep.subr.mxu0 0.0
        %1703 = vmatpush2.msra.mxu0 0.0
        %1704 = vmatprep.subr.mxu0 0.0
        %1705 = vmatpush2.msra.mxu0 0.0
        %1706 = vmatprep.subr.mxu0 0.0
        %1707 = vmatpush2.msra.mxu0 0.0
        %1708 = vmatprep.subr.mxu0 0.0
        %1709 = vmatpush2.msra.mxu0 0.0
        %1710 = vmatprep.subr.mxu0 0.0
        %1711 = vmatpush2.msra.mxu0 0.0
        %1712 = vmatprep.subr.mxu0 0.0
        %1713 = vmatpush2.msra.mxu0 0.0
        %1714 = vmatprep.subr.mxu0 0.0
        %1715 = vmatpush2.msra.mxu0 0.0
        %1716 = vmatprep.subr.mxu0 0.0
        %1717 = vmatpush2.msra.mxu0 0.0
        %1718 = vmatprep.subr.mxu0 0.0
        %1719 = vmatpush2.msra.mxu0 0.0
        %1720 = vmatprep.subr.mxu0 0.0
        %1721 = vmatpush2.msra.mxu0 0.0
        %1722 = vmatprep.mubr.f32.mxu0 0.0
        %1723 = vmatmul.mubr.f32.gmra.mxu0 %v1656
        %v1724 = vpop.f32.mrf.mxu0
        %v1725 = vadd.f32 %v1654, %v1724
        %v1726 = vpop.f32.mrf.mxu0
        %v1727 = vadd.f32 %v1654, %v1726
        %1728 = vdwg.mxu0
        %1729 = vmatprep.subr.mxu0 0.0
        %1730 = vmatpush1.msra.mxu0 0.0
        %1731 = vmatprep.subr.mxu0 0.0
        %1732 = vmatpush1.msra.mxu0 0.0
        %1733 = vmatprep.subr.mxu0 0.0
        %1734 = vmatpush1.msra.mxu0 0.0
        %1735 = vmatprep.subr.mxu0 0.0
        %1736 = vmatpush1.msra.mxu0 0.0
        %1737 = vmatprep.subr.mxu0 0.0
        %1738 = vmatpush1.msra.mxu0 0.0
        %1739 = vmatprep.subr.mxu0 0.0
        %1740 = vmatpush1.msra.mxu0 0.0
        %1741 = vmatprep.subr.mxu0 0.0
        %1742 = vmatpush1.msra.mxu0 0.0
        %1743 = vmatprep.subr.mxu0 0.0
        %1744 = vmatpush1.msra.mxu0 0.0
        %1745 = vmatprep.subr.mxu0 0.0
        %1746 = vmatpush1.msra.mxu0 0.0
        %1747 = vmatprep.subr.mxu0 0.0
        %1748 = vmatpush1.msra.mxu0 0.0
        %1749 = vmatprep.subr.mxu0 0.0
        %1750 = vmatpush1.msra.mxu0 0.0
        %1751 = vmatprep.subr.mxu0 0.0
        %1752 = vmatpush1.msra.mxu0 0.0
        %1753 = vmatprep.subr.mxu0 %v1643
        %1754 = vmatpush1.msra.mxu0 %v1642
        %1755 = vmatprep.subr.mxu0 %v1639
        %1756 = vmatpush1.msra.mxu0 %v1638
        %1757 = vmatprep.subr.mxu0 %v1635
        %1758 = vmatpush1.msra.mxu0 %v1634
        %1759 = vmatprep.subr.mxu0 %v1631
        %1760 = vmatpush1.msra.mxu0 %v1630
        %1761 = vmatprep.subr.mxu0 0.0
        %1762 = vmatpush2.msra.mxu0 0.0
        %1763 = vmatprep.subr.mxu0 0.0
        %1764 = vmatpush2.msra.mxu0 0.0
        %1765 = vmatprep.subr.mxu0 0.0
        %1766 = vmatpush2.msra.mxu0 0.0
        %1767 = vmatprep.subr.mxu0 0.0
        %1768 = vmatpush2.msra.mxu0 0.0
        %1769 = vmatprep.subr.mxu0 0.0
        %1770 = vmatpush2.msra.mxu0 0.0
        %1771 = vmatprep.subr.mxu0 0.0
        %1772 = vmatpush2.msra.mxu0 0.0
        %1773 = vmatprep.subr.mxu0 0.0
        %1774 = vmatpush2.msra.mxu0 0.0
        %1775 = vmatprep.subr.mxu0 0.0
        %1776 = vmatpush2.msra.mxu0 0.0
        %1777 = vmatprep.subr.mxu0 0.0
        %1778 = vmatpush2.msra.mxu0 0.0
        %1779 = vmatprep.subr.mxu0 0.0
        %1780 = vmatpush2.msra.mxu0 0.0
        %1781 = vmatprep.subr.mxu0 0.0
        %1782 = vmatpush2.msra.mxu0 0.0
        %1783 = vmatprep.subr.mxu0 0.0
        %1784 = vmatpush2.msra.mxu0 0.0
        %1785 = vmatprep.subr.mxu0 0.0
        %1786 = vmatpush2.msra.mxu0 0.0
        %1787 = vmatprep.subr.mxu0 0.0
        %1788 = vmatpush2.msra.mxu0 0.0
        %1789 = vmatprep.subr.mxu0 0.0
        %1790 = vmatpush2.msra.mxu0 0.0
        %1791 = vmatprep.subr.mxu0 0.0
        %1792 = vmatpush2.msra.mxu0 0.0
        %1793 = vmatprep.mubr.f32.mxu0 0.0
        %1794 = vmatmul.mubr.f32.gmra.mxu0 %v1656
        %v1795 = vpop.f32.mrf.mxu0
        %v1796 = vadd.f32 %v1654, %v1795
        %v1797 = vpop.f32.mrf.mxu0
        %v1798 = vadd.f32 %v1654, %v1797
        %1799 = vdwg.mxu0
        %v1804 = vcombine.low %v1725, %v1727
        %v1805 = vcombine.low %v1796, %v1798
        %v1807 = vunpack.c.l.s4 1966171168
        %v1808 = vunpack.c.0.s8 %v1807
        %v1809 = vlaneseq
        %v1810 = vshrl.u32 %v1809, 7
        %v1811 = vsub.s32 %v1808, %v1810
        %v1812 = vrot.slane %v1804, %v1811
        %v1814 = vunpack.c.l.s4 1966171168
        %v1815 = vunpack.c.0.s8 %v1814
        %v1816 = vlaneseq
        %v1817 = vshrl.u32 %v1816, 7
        %v1818 = vsub.s32 %v1815, %v1817
        %v1819 = vrot.slane %v1805, %v1818
        %v1820 = vcombine.low %v1812, %v1819
        %v1822 = vunpack.c.l.s4 1966171168
        %v1823 = vunpack.c.0.s8 %v1822
        %v1824 = vlaneseq
        %v1825 = vshrl.u32 %v1824, 7
        %v1826 = vsub.s32 %v1823, %v1825
        %v1827 = vrot.slane %v1820, %v1826
        %v1829 = vlaneseq
        %vm1830 = vcmp.ge.s32.totalorder %v1829, 0
        %vm1831 = vcmp.lt.s32.totalorder %v1829, 512
        %vm1832 = vmand %vm1830, %vm1831
        %1833 = vst.msk [vmem:[%s436] sm:$0xf] %vm1832, %v1827
        %s1834 = sand.u32 %s315, 1
        %s1835 = scalar_lea.sflag [#allocation4], %s1834
        %s1836 = sand.u32 %s315, 1
        %s1837 = smul.addr %s1836, 4
        %s1838 = scalar_lea.vmem [#allocation3], %s1837
        // Predicated region
        $region73: #{tpu_custom_call.1} parent=71 // pred_check
          %p1839 = pneg %p325
        $region74: #{tpu_custom_call.1} parent=71 // pred_check_branch
          %1841 = sbr.rel (%p1839) target = $region76
        $region75: #{tpu_custom_call.1} parent=71 // pred_region
          %s1842 = smul.u32 4, %s29
          %s1844 = ssub.s32 64, 64
          %1845 = vsyncadd %s1835, %s1844
          %s1846 = smul.addr %s1842, 16
          %s1847 = scalar_lea.hbm %s13, %s1846
          %s1849 = sshll.u32 %s1838, 4
          %s1850 = int_to_ptr.vmem [resolvable:$true] %s1849
          %1852 = dma.vmem_to_hbm [thread:$0]  %s1850, 64, %s1847, %s1835
        $region76: #{tpu_custom_call.1} parent=71 // pred_fallthru
          _
      $region72: #{tpu_custom_call.1} parent=5 // pred_fallthru
        _
      %p1853 = scmp.le.s32.totalorder 2, %s24
      // Predicated region
      $region77: #{tpu_custom_call.1} parent=5 // pred_check
        %p1854 = pneg %p1853
      $region78: #{tpu_custom_call.1} parent=5 // pred_check_branch
        %1856 = sbr.rel (%p1854) target = $region80
      $region79: #{tpu_custom_call.1} parent=5 // pred_region
        %s1857 = ssub.s32 %s24, 2
        // Predicated region
        $region81: #{tpu_custom_call.1} parent=79 // pred_check
          %p1858 = pneg %p331
        $region82: #{tpu_custom_call.1} parent=79 // pred_check_branch
          %1860 = sbr.rel (%p1858) target = $region84
        $region83: #{tpu_custom_call.1} parent=79 // pred_region
          %s1861 = sand.u32 %s316, 1
          %s1862 = scalar_lea.sflag [#allocation4], %s1861
          %s1863 = sand.u32 %s316, 1
          %s1864 = smul.addr %s1863, 4
          %s1865 = scalar_lea.vmem [#allocation3], %s1864
          %1866 = dma.done %s1862, 64
        $region84: #{tpu_custom_call.1} parent=79 // pred_fallthru
          _
      $region80: #{tpu_custom_call.1} parent=5 // pred_fallthru
        _
    $region6: #{tpu_custom_call.1} parent=1 // loop_footer
      %s28 = sadd.s32 1, %s24
    $region7: #{tpu_custom_call.1} parent=1 // loop_footer_branch
      %23 = sbr.rel target = $region3
    $region8: #{tpu_custom_call.1} parent=1 // loop_exit
      _
    %1867 = vsyncpa [#allocation4], 1
    %s1868 = scalar_lea.sflag [#allocation4], 1
    %1869 = vsyncpa %s1868, 1

</llo_original>
